<compile_context>
chip_gen: v7x
topology: tpu7x:2x2x1
jax: 0.10.0
libtpu: 0.0.40
codegen_flags: <defaults>
</compile_context>

<pallas_src>
import functools

import numpy as np
import jax
import jax.numpy as jnp
from jax.experimental import pallas as pl
from jax.experimental.pallas import tpu as pltpu

K = 7     # Conv3d kernel size (7, 7, 7)
PAD = 3   # 'same' padding for kernel 7, stride 1


def _round_up(x, m):
    return ((x + m - 1) // m) * m


def _largest_divisor_leq(n, cap):
    best = 1
    for d in range(1, n + 1):
        if n % d == 0 and d <= cap:
            best = d
    return best


def _spatial_att_kernel(x_ref, taps_ref, bias_ref, out_ref, lhs_ref,
                        *, Bn, C, D, Dp, H, W, LK):
    HW = H * W
    M = Bn * C * D          # rows of the flattened x / pooled tensors
    Mp = Bn * C * Dp        # rows of the conv matmuls (D padded to sublane multiple)

    # ------------------------------------------------------------ pooling
    # x block is lane-dense (Bn, C, D, H*W): each group of W consecutive lanes
    # is one (h, :) row, so max/mean over W are reductions over contiguous
    # lane segments (no lane-splitting reshape).
    x_flat = x_ref[...].reshape(M, HW)                    # minor dim unchanged
    maxs, sums = [], []
    for h in range(H):                                    # static unroll, H small
        seg = x_flat[:, h * W:(h + 1) * W]                # (M, W)
        maxs.append(jnp.max(seg, axis=-1, keepdims=True))
        sums.append(jnp.sum(seg, axis=-1, keepdims=True))
    x_max = jnp.concatenate(maxs, axis=-1)                # (M, H)
    x_avg = jnp.concatenate(sums, axis=-1) * (1.0 / W)    # (M, H)
    # channel 0 = max, channel 1 = avg (matches torch.cat((x_max, x_avg), -1))
    pooled = jnp.concatenate([x_max, x_avg], axis=-1)     # (M, 2H)
    pooled = pooled.reshape(Bn, C, D, 2 * H)

    # --------------------------------------- conv LHS (im2col along D + C halo)
    # lhs_ref[b, PAD+c, d, kd*2H + ic*H + j] = pooled[b, ic, c, d+kd-PAD, j]
    # with zeros outside the valid C/D ranges and in the LK lane padding.
    lhs_ref[...] = jnp.zeros_like(lhs_ref)
    for kd in range(K):
        lo = max(0, PAD - kd)
        hi = min(D, D + PAD - kd)
        if hi > lo:
            lhs_ref[:, PAD:PAD + C, lo:hi, kd * 2 * H:(kd + 1) * 2 * H] = (
                pooled[:, :, lo + kd - PAD:hi + kd - PAD, :])

    # -------------------- Conv3d(2, 1, (7,7,7), 'same') as 7 MXU matmuls:
    # contraction = lane-padded K*2H (kd taps + 2 channels + H Toeplitz taps),
    # M = Bn*C*Dp so the slab reshape below is layout-free.
    acc = jnp.zeros((Mp, H), jnp.float32)
    for kc in range(K):
        slab = lhs_ref[:, kc:kc + C, :, :]                # (Bn, C, Dp, LK)
        acc = acc + jnp.dot(slab.reshape(Mp, LK), taps_ref[kc],
                            preferred_element_type=jnp.float32)

    att = 1.0 / (1.0 + jnp.exp(-(acc + bias_ref[0])))     # sigmoid, (Mp, H)

    # ---------------- broadcast att over W with one exact 0/1 MXU matmul:
    # emat[h, l] = 1 if l // W == h else 0  ->  att_b[:, l] = att[:, l // W]
    col = jax.lax.broadcasted_iota(jnp.int32, (H, HW), 1)
    row = jax.lax.broadcasted_iota(jnp.int32, (H, HW), 0)
    emat = jnp.where((col >= row * W) & (col < row * W + W), 1.0, 0.0)
    att_b = jnp.dot(att, emat, preferred_element_type=jnp.float32)   # (Mp, HW)
    att_b = att_b.reshape(Bn, C, Dp, HW)[:, :, :D, :]     # drop Dp padding rows

    out_ref[...] = (x_ref[...] * att_b).astype(out_ref.dtype)


def spatial_att(x, conv_weight, conv_bias):
    """x: (N, C, D, H, W) float32; conv_weight: (1, 2, 7, 7, 7); conv_bias: (1,)."""
    N, C, D, H, W = x.shape
    HW = H * W
    Dp = _round_up(D, 8)                 # sublane-aligned D for the conv scratch
    LK = _round_up(K * 2 * H, 128)       # lane-padded contraction dim

    # Toeplitz taps: taps[kc, kd*2H + ic*H + j, h] = w[ic, kc, kd, j - h + PAD]
    # ('same' zero padding along H encoded as zeros; rows >= K*2H are zero).
    w = conv_weight[0].astype(jnp.float32)                # (2, K, K, K) = [ic, kc, kd, kh]
    j = jnp.arange(H)[:, None]
    h = jnp.arange(H)[None, :]
    kh = j - h + PAD
    valid = (kh >= 0) & (kh < K)
    t = jnp.where(valid[None, None, None],
                  w[:, :, :, jnp.clip(kh, 0, K - 1)], 0.0)        # (2, K, K, H, H)
    taps = jnp.transpose(t, (1, 2, 0, 3, 4)).reshape(K, K * 2 * H, H)
    taps = jnp.pad(taps, ((0, 0), (0, LK - K * 2 * H), (0, 0)))

    # Per-generation VMEM budget (v5e/v6e: ~96 MiB, v7x: ~48 MiB) and Bn choice.
    try:
        vmem_cap = int(pltpu.get_tpu_info().vmem_capacity_bytes)
    except Exception:
        vmem_cap = 64 * 1024 * 1024                       # conservative fallback
    vmem_limit = min(max(vmem_cap * 3 // 4, 32 * 1024 * 1024), 96 * 1024 * 1024)

    per_sample = C * D * HW * 4                           # one lane-dense x/out block
    lhs_per_sample = (C + 2 * PAD) * Dp * LK * 4          # conv scratch
    taps_bytes = 2 * K * LK * H * 4                       # (double-buffered input)
    per_bn = 4 * per_sample + lhs_per_sample              # 2 in bufs + 2 out bufs + scratch
    budget = (vmem_limit * 3) // 5 - taps_bytes
    bn_cap = max(1, min(N, budget // per_bn))
    bn = _largest_divisor_leq(N, bn_cap)
    while bn > 1 and N // bn < 2:                         # keep >= 2 grid steps (pipelining / megacore)
        bn = _largest_divisor_leq(N, bn - 1)

    x_m = x.reshape(N, C, D, HW)                          # free: H, W are contiguous in HBM

    kernel = functools.partial(_spatial_att_kernel,
                               Bn=bn, C=C, D=D, Dp=Dp, H=H, W=W, LK=LK)
    out_m = pl.pallas_call(
        kernel,
        out_shape=jax.ShapeDtypeStruct((N, C, D, HW), x.dtype),
        grid=(N // bn,),
        in_specs=[
            pl.BlockSpec((bn, C, D, HW), lambda n: (n, 0, 0, 0)),
            # Loop-invariant taps: constant block index -> no per-step re-DMA.
            pl.BlockSpec((K, LK, H), lambda n: (0, 0, 0)),
            pl.BlockSpec(memory_space=pltpu.MemorySpace.SMEM),
        ],
        out_specs=pl.BlockSpec((bn, C, D, HW), lambda n: (n, 0, 0, 0)),
        scratch_shapes=[pltpu.VMEM((bn, C + 2 * PAD, Dp, LK), jnp.float32)],
        compiler_params=pltpu.CompilerParams(
            dimension_semantics=("parallel",),
            vmem_limit_bytes=vmem_limit,
        ),
    )(x_m, taps, conv_bias.astype(jnp.float32))
    return out_m.reshape(N, C, D, H, W)


def spatial_att_reference(x, conv_weight, conv_bias):
    """Pure-numpy reference mirroring the PyTorch forward."""
    xn = np.asarray(x, dtype=np.float64)
    wn = np.asarray(conv_weight, dtype=np.float64)[0]     # (2, 7, 7, 7)
    bn = float(np.asarray(conv_bias, dtype=np.float64)[0])
    N, C, D, H, W = xn.shape
    x_max = xn.max(axis=-1)
    x_avg = xn.mean(axis=-1)
    inp = np.stack([x_max, x_avg], axis=1)                # (N, 2, C, D, H)
    padded = np.zeros((N, 2, C + 2 * PAD, D + 2 * PAD, H + 2 * PAD))
    padded[:, :, PAD:PAD + C, PAD:PAD + D, PAD:PAD + H] = inp
    conv = np.zeros((N, C, D, H))
    for ic in range(2):
        for kc in range(K):
            for kd in range(K):
                for kh in range(K):
                    conv += wn[ic, kc, kd, kh] * \
                        padded[:, ic, kc:kc + C, kd:kd + D, kh:kh + H]
    att = 1.0 / (1.0 + np.exp(-(conv + bn)))
    return xn * att[..., None]


if __name__ == "__main__":
    key = jax.random.PRNGKey(0)
    kx, kw, kb = jax.random.split(key, 3)

    N, C, D, H, W = 2, 4, 8, 8, 16
    x = jax.random.normal(kx, (N, C, D, H, W), dtype=jnp.float32)
    conv_weight = 0.05 * jax.random.normal(kw, (1, 2, K, K, K), dtype=jnp.float32)
    conv_bias = 0.05 * jax.random.normal(kb, (1,), dtype=jnp.float32)

    out = jax.jit(spatial_att)(x, conv_weight, conv_bias)
    out = jax.block_until_ready(out)

    ref = spatial_att_reference(x, conv_weight, conv_bias)
    np.testing.assert_allclose(np.asarray(out), ref, rtol=1e-3, atol=1e-3)
    print("KERNEL_OK")
</pallas_src>

<mosaic_0001>
module attributes {stable_mosaic.version = 11 : i64} {
  func.func @_spatial_att_kernel(%arg0: i32, %arg1: memref<1x4x8x128xf32, #tpu.memory_space<vmem>>, %arg2: memref<7x128x8xf32, #tpu.memory_space<vmem>>, %arg3: memref<1xf32, #tpu.memory_space<smem>>, %arg4: memref<1x4x8x128xf32, #tpu.memory_space<vmem>>, %arg5: memref<1x10x8x128xf32, #tpu.memory_space<vmem>>) attributes {dimension_semantics = [#tpu.dimension_semantics<parallel>], iteration_bounds = array<i64: 2>, scalar_prefetch = 0 : i64, scratch_operands = 1 : i64, tpu.core_type = #tpu.core_type<tc>, window_params = [{transform_indices = @transform_0, window_bounds = array<i64: 1, 4, 8, 128>}, {pipeline_mode = #tpu.pipeline_mode<synchronous>, transform_indices = @transform_1, window_bounds = array<i64: 7, 128, 8>}, {transform_indices = @transform_2, window_bounds = array<i64: 1>}, {transform_indices = @transform_3, window_bounds = array<i64: 1, 4, 8, 128>}]} {
    %c0 = arith.constant 0 : index
    %c0_0 = arith.constant 0 : index
    %c0_1 = arith.constant 0 : index
    %c0_2 = arith.constant 0 : index
    %0 = vector.load %arg1[%c0, %c0_0, %c0_1, %c0_2] : memref<1x4x8x128xf32, #tpu.memory_space<vmem>>, vector<1x4x8x128xf32>
    %1 = vector.shape_cast %0 : vector<1x4x8x128xf32> to vector<32x128xf32>
    %2 = vector.extract_strided_slice %1 {offsets = [0, 0], sizes = [32, 16], strides = [1, 1]} : vector<32x128xf32> to vector<32x16xf32>
    %cst = arith.constant dense<0xFF800000> : vector<32xf32>
    %3 = vector.multi_reduction <maximumf>, %2, %cst [1] : vector<32x16xf32> to vector<32xf32>
    %4 = vector.shape_cast %3 : vector<32xf32> to vector<32x1xf32>
    %cst_3 = arith.constant dense<0.000000e+00> : vector<32xf32>
    %5 = vector.multi_reduction <add>, %2, %cst_3 [1] : vector<32x16xf32> to vector<32xf32>
    %6 = vector.shape_cast %5 : vector<32xf32> to vector<32x1xf32>
    %7 = vector.extract_strided_slice %1 {offsets = [0, 16], sizes = [32, 16], strides = [1, 1]} : vector<32x128xf32> to vector<32x16xf32>
    %cst_4 = arith.constant dense<0xFF800000> : vector<32xf32>
    %8 = vector.multi_reduction <maximumf>, %7, %cst_4 [1] : vector<32x16xf32> to vector<32xf32>
    %9 = vector.shape_cast %8 : vector<32xf32> to vector<32x1xf32>
    %cst_5 = arith.constant dense<0.000000e+00> : vector<32xf32>
    %10 = vector.multi_reduction <add>, %7, %cst_5 [1] : vector<32x16xf32> to vector<32xf32>
    %11 = vector.shape_cast %10 : vector<32xf32> to vector<32x1xf32>
    %12 = vector.extract_strided_slice %1 {offsets = [0, 32], sizes = [32, 16], strides = [1, 1]} : vector<32x128xf32> to vector<32x16xf32>
    %cst_6 = arith.constant dense<0xFF800000> : vector<32xf32>
    %13 = vector.multi_reduction <maximumf>, %12, %cst_6 [1] : vector<32x16xf32> to vector<32xf32>
    %14 = vector.shape_cast %13 : vector<32xf32> to vector<32x1xf32>
    %cst_7 = arith.constant dense<0.000000e+00> : vector<32xf32>
    %15 = vector.multi_reduction <add>, %12, %cst_7 [1] : vector<32x16xf32> to vector<32xf32>
    %16 = vector.shape_cast %15 : vector<32xf32> to vector<32x1xf32>
    %17 = vector.extract_strided_slice %1 {offsets = [0, 48], sizes = [32, 16], strides = [1, 1]} : vector<32x128xf32> to vector<32x16xf32>
    %cst_8 = arith.constant dense<0xFF800000> : vector<32xf32>
    %18 = vector.multi_reduction <maximumf>, %17, %cst_8 [1] : vector<32x16xf32> to vector<32xf32>
    %19 = vector.shape_cast %18 : vector<32xf32> to vector<32x1xf32>
    %cst_9 = arith.constant dense<0.000000e+00> : vector<32xf32>
    %20 = vector.multi_reduction <add>, %17, %cst_9 [1] : vector<32x16xf32> to vector<32xf32>
    %21 = vector.shape_cast %20 : vector<32xf32> to vector<32x1xf32>
    %22 = vector.extract_strided_slice %1 {offsets = [0, 64], sizes = [32, 16], strides = [1, 1]} : vector<32x128xf32> to vector<32x16xf32>
    %cst_10 = arith.constant dense<0xFF800000> : vector<32xf32>
    %23 = vector.multi_reduction <maximumf>, %22, %cst_10 [1] : vector<32x16xf32> to vector<32xf32>
    %24 = vector.shape_cast %23 : vector<32xf32> to vector<32x1xf32>
    %cst_11 = arith.constant dense<0.000000e+00> : vector<32xf32>
    %25 = vector.multi_reduction <add>, %22, %cst_11 [1] : vector<32x16xf32> to vector<32xf32>
    %26 = vector.shape_cast %25 : vector<32xf32> to vector<32x1xf32>
    %27 = vector.extract_strided_slice %1 {offsets = [0, 80], sizes = [32, 16], strides = [1, 1]} : vector<32x128xf32> to vector<32x16xf32>
    %cst_12 = arith.constant dense<0xFF800000> : vector<32xf32>
    %28 = vector.multi_reduction <maximumf>, %27, %cst_12 [1] : vector<32x16xf32> to vector<32xf32>
    %29 = vector.shape_cast %28 : vector<32xf32> to vector<32x1xf32>
    %cst_13 = arith.constant dense<0.000000e+00> : vector<32xf32>
    %30 = vector.multi_reduction <add>, %27, %cst_13 [1] : vector<32x16xf32> to vector<32xf32>
    %31 = vector.shape_cast %30 : vector<32xf32> to vector<32x1xf32>
    %32 = vector.extract_strided_slice %1 {offsets = [0, 96], sizes = [32, 16], strides = [1, 1]} : vector<32x128xf32> to vector<32x16xf32>
    %cst_14 = arith.constant dense<0xFF800000> : vector<32xf32>
    %33 = vector.multi_reduction <maximumf>, %32, %cst_14 [1] : vector<32x16xf32> to vector<32xf32>
    %34 = vector.shape_cast %33 : vector<32xf32> to vector<32x1xf32>
    %cst_15 = arith.constant dense<0.000000e+00> : vector<32xf32>
    %35 = vector.multi_reduction <add>, %32, %cst_15 [1] : vector<32x16xf32> to vector<32xf32>
    %36 = vector.shape_cast %35 : vector<32xf32> to vector<32x1xf32>
    %37 = vector.extract_strided_slice %1 {offsets = [0, 112], sizes = [32, 16], strides = [1, 1]} : vector<32x128xf32> to vector<32x16xf32>
    %cst_16 = arith.constant dense<0xFF800000> : vector<32xf32>
    %38 = vector.multi_reduction <maximumf>, %37, %cst_16 [1] : vector<32x16xf32> to vector<32xf32>
    %39 = vector.shape_cast %38 : vector<32xf32> to vector<32x1xf32>
    %cst_17 = arith.constant dense<0.000000e+00> : vector<32xf32>
    %40 = vector.multi_reduction <add>, %37, %cst_17 [1] : vector<32x16xf32> to vector<32xf32>
    %41 = vector.shape_cast %40 : vector<32xf32> to vector<32x1xf32>
    %42 = tpu.concatenate %4, %9, %14, %19, %24, %29, %34, %39 in 1 : vector<32x1xf32>, vector<32x1xf32>, vector<32x1xf32>, vector<32x1xf32>, vector<32x1xf32>, vector<32x1xf32>, vector<32x1xf32>, vector<32x1xf32> -> vector<32x8xf32>
    %43 = tpu.concatenate %6, %11, %16, %21, %26, %31, %36, %41 in 1 : vector<32x1xf32>, vector<32x1xf32>, vector<32x1xf32>, vector<32x1xf32>, vector<32x1xf32>, vector<32x1xf32>, vector<32x1xf32>, vector<32x1xf32> -> vector<32x8xf32>
    %cst_18 = arith.constant 6.250000e-02 : f32
    %44 = vector.broadcast %cst_18 : f32 to vector<32x8xf32>
    %45 = arith.mulf %43, %44 : vector<32x8xf32>
    %46 = tpu.concatenate %42, %45 in 1 : vector<32x8xf32>, vector<32x8xf32> -> vector<32x16xf32>
    %47 = vector.shape_cast %46 : vector<32x16xf32> to vector<1x4x8x16xf32>
    %cst_19 = arith.constant 0.000000e+00 : f32
    %48 = vector.broadcast %cst_19 : f32 to vector<1x10x8x128xf32>
    %c0_20 = arith.constant 0 : index
    %c0_21 = arith.constant 0 : index
    %c0_22 = arith.constant 0 : index
    %c0_23 = arith.constant 0 : index
    %49 = vector.load %arg5[%c0_20, %c0_21, %c0_22, %c0_23] : memref<1x10x8x128xf32, #tpu.memory_space<vmem>>, vector<1x10x8x128xf32>
    tpu.vector_store %arg5[%c0_20, %c0_21, %c0_22, %c0_23], %48 {strides = array<i32>} : memref<1x10x8x128xf32, #tpu.memory_space<vmem>>, vector<1x10x8x128xf32>,
    %50 = vector.extract_strided_slice %47 {offsets = [0, 0, 0, 0], sizes = [1, 4, 5, 16], strides = [1, 1, 1, 1]} : vector<1x4x8x16xf32> to vector<1x4x5x16xf32>
    %c0_24 = arith.constant 0 : index
    %c3 = arith.constant 3 : index
    %c3_25 = arith.constant 3 : index
    %c0_26 = arith.constant 0 : index
    %51 = vector.load %arg5[%c0_24, %c3, %c3_25, %c0_26] : memref<1x10x8x128xf32, #tpu.memory_space<vmem>>, vector<1x4x5x16xf32>
    tpu.vector_store %arg5[%c0_24, %c3, %c3_25, %c0_26], %50 {strides = array<i32>} : memref<1x10x8x128xf32, #tpu.memory_space<vmem>>, vector<1x4x5x16xf32>,
    %52 = vector.extract_strided_slice %47 {offsets = [0, 0, 0, 0], sizes = [1, 4, 6, 16], strides = [1, 1, 1, 1]} : vector<1x4x8x16xf32> to vector<1x4x6x16xf32>
    %c0_27 = arith.constant 0 : index
    %c3_28 = arith.constant 3 : index
    %c2 = arith.constant 2 : index
    %c16 = arith.constant 16 : index
    %53 = vector.load %arg5[%c0_27, %c3_28, %c2, %c16] : memref<1x10x8x128xf32, #tpu.memory_space<vmem>>, vector<1x4x6x16xf32>
    tpu.vector_store %arg5[%c0_27, %c3_28, %c2, %c16], %52 {strides = array<i32>} : memref<1x10x8x128xf32, #tpu.memory_space<vmem>>, vector<1x4x6x16xf32>,
    %54 = vector.extract_strided_slice %47 {offsets = [0, 0, 0, 0], sizes = [1, 4, 7, 16], strides = [1, 1, 1, 1]} : vector<1x4x8x16xf32> to vector<1x4x7x16xf32>
    %c0_29 = arith.constant 0 : index
    %c3_30 = arith.constant 3 : index
    %c1 = arith.constant 1 : index
    %c32 = arith.constant 32 : index
    %55 = vector.load %arg5[%c0_29, %c3_30, %c1, %c32] : memref<1x10x8x128xf32, #tpu.memory_space<vmem>>, vector<1x4x7x16xf32>
    tpu.vector_store %arg5[%c0_29, %c3_30, %c1, %c32], %54 {strides = array<i32>} : memref<1x10x8x128xf32, #tpu.memory_space<vmem>>, vector<1x4x7x16xf32>,
    %c0_31 = arith.constant 0 : index
    %c3_32 = arith.constant 3 : index
    %c0_33 = arith.constant 0 : index
    %c48 = arith.constant 48 : index
    %56 = vector.load %arg5[%c0_31, %c3_32, %c0_33, %c48] : memref<1x10x8x128xf32, #tpu.memory_space<vmem>>, vector<1x4x8x16xf32>
    tpu.vector_store %arg5[%c0_31, %c3_32, %c0_33, %c48], %47 {strides = array<i32>} : memref<1x10x8x128xf32, #tpu.memory_space<vmem>>, vector<1x4x8x16xf32>,
    %57 = vector.extract_strided_slice %47 {offsets = [0, 0, 1, 0], sizes = [1, 4, 7, 16], strides = [1, 1, 1, 1]} : vector<1x4x8x16xf32> to vector<1x4x7x16xf32>
    %c0_34 = arith.constant 0 : index
    %c3_35 = arith.constant 3 : index
    %c0_36 = arith.constant 0 : index
    %c64 = arith.constant 64 : index
    %58 = vector.load %arg5[%c0_34, %c3_35, %c0_36, %c64] : memref<1x10x8x128xf32, #tpu.memory_space<vmem>>, vector<1x4x7x16xf32>
    tpu.vector_store %arg5[%c0_34, %c3_35, %c0_36, %c64], %57 {strides = array<i32>} : memref<1x10x8x128xf32, #tpu.memory_space<vmem>>, vector<1x4x7x16xf32>,
    %59 = vector.extract_strided_slice %47 {offsets = [0, 0, 2, 0], sizes = [1, 4, 6, 16], strides = [1, 1, 1, 1]} : vector<1x4x8x16xf32> to vector<1x4x6x16xf32>
    %c0_37 = arith.constant 0 : index
    %c3_38 = arith.constant 3 : index
    %c0_39 = arith.constant 0 : index
    %c80 = arith.constant 80 : index
    %60 = vector.load %arg5[%c0_37, %c3_38, %c0_39, %c80] : memref<1x10x8x128xf32, #tpu.memory_space<vmem>>, vector<1x4x6x16xf32>
    tpu.vector_store %arg5[%c0_37, %c3_38, %c0_39, %c80], %59 {strides = array<i32>} : memref<1x10x8x128xf32, #tpu.memory_space<vmem>>, vector<1x4x6x16xf32>,
    %61 = vector.extract_strided_slice %47 {offsets = [0, 0, 3, 0], sizes = [1, 4, 5, 16], strides = [1, 1, 1, 1]} : vector<1x4x8x16xf32> to vector<1x4x5x16xf32>
    %c0_40 = arith.constant 0 : index
    %c3_41 = arith.constant 3 : index
    %c0_42 = arith.constant 0 : index
    %c96 = arith.constant 96 : index
    %62 = vector.load %arg5[%c0_40, %c3_41, %c0_42, %c96] : memref<1x10x8x128xf32, #tpu.memory_space<vmem>>, vector<1x4x5x16xf32>
    tpu.vector_store %arg5[%c0_40, %c3_41, %c0_42, %c96], %61 {strides = array<i32>} : memref<1x10x8x128xf32, #tpu.memory_space<vmem>>, vector<1x4x5x16xf32>,
    %cst_43 = arith.constant 0.000000e+00 : f32
    %63 = vector.broadcast %cst_43 : f32 to vector<32x8xf32>
    %c0_44 = arith.constant 0 : index
    %c0_45 = arith.constant 0 : index
    %c0_46 = arith.constant 0 : index
    %c0_47 = arith.constant 0 : index
    %64 = vector.load %arg5[%c0_44, %c0_45, %c0_46, %c0_47] : memref<1x10x8x128xf32, #tpu.memory_space<vmem>>, vector<1x4x8x128xf32>
    %65 = vector.shape_cast %64 : vector<1x4x8x128xf32> to vector<32x128xf32>
    %c0_48 = arith.constant 0 : index
    %c0_49 = arith.constant 0 : index
    %c0_50 = arith.constant 0 : index
    %66 = vector.load %arg2[%c0_48, %c0_49, %c0_50] : memref<7x128x8xf32, #tpu.memory_space<vmem>>, vector<1x128x8xf32>
    %67 = vector.shape_cast %66 : vector<1x128x8xf32> to vector<128x8xf32>
    %cst_51 = arith.constant dense<0.000000e+00> : vector<32x8xf32>
    %68 = tpu.matmul %65, %67, %cst_51 {dimension_numbers = #tpu.dot_dimension_numbers<[1], [0], [0], [1], [0, 0, 1, 1], [], []>} : vector<32x128xf32>, vector<128x8xf32>, vector<32x8xf32> -> vector<32x8xf32>
    %69 = arith.addf %63, %68 : vector<32x8xf32>
    %c0_52 = arith.constant 0 : index
    %c1_53 = arith.constant 1 : index
    %c0_54 = arith.constant 0 : index
    %c0_55 = arith.constant 0 : index
    %70 = vector.load %arg5[%c0_52, %c1_53, %c0_54, %c0_55] : memref<1x10x8x128xf32, #tpu.memory_space<vmem>>, vector<1x4x8x128xf32>
    %71 = vector.shape_cast %70 : vector<1x4x8x128xf32> to vector<32x128xf32>
    %c1_56 = arith.constant 1 : index
    %c0_57 = arith.constant 0 : index
    %c0_58 = arith.constant 0 : index
    %72 = vector.load %arg2[%c1_56, %c0_57, %c0_58] : memref<7x128x8xf32, #tpu.memory_space<vmem>>, vector<1x128x8xf32>
    %73 = vector.shape_cast %72 : vector<1x128x8xf32> to vector<128x8xf32>
    %cst_59 = arith.constant dense<0.000000e+00> : vector<32x8xf32>
    %74 = tpu.matmul %71, %73, %cst_59 {dimension_numbers = #tpu.dot_dimension_numbers<[1], [0], [0], [1], [0, 0, 1, 1], [], []>} : vector<32x128xf32>, vector<128x8xf32>, vector<32x8xf32> -> vector<32x8xf32>
    %75 = arith.addf %69, %74 : vector<32x8xf32>
    %c0_60 = arith.constant 0 : index
    %c2_61 = arith.constant 2 : index
    %c0_62 = arith.constant 0 : index
    %c0_63 = arith.constant 0 : index
    %76 = vector.load %arg5[%c0_60, %c2_61, %c0_62, %c0_63] : memref<1x10x8x128xf32, #tpu.memory_space<vmem>>, vector<1x4x8x128xf32>
    %77 = vector.shape_cast %76 : vector<1x4x8x128xf32> to vector<32x128xf32>
    %c2_64 = arith.constant 2 : index
    %c0_65 = arith.constant 0 : index
    %c0_66 = arith.constant 0 : index
    %78 = vector.load %arg2[%c2_64, %c0_65, %c0_66] : memref<7x128x8xf32, #tpu.memory_space<vmem>>, vector<1x128x8xf32>
    %79 = vector.shape_cast %78 : vector<1x128x8xf32> to vector<128x8xf32>
    %cst_67 = arith.constant dense<0.000000e+00> : vector<32x8xf32>
    %80 = tpu.matmul %77, %79, %cst_67 {dimension_numbers = #tpu.dot_dimension_numbers<[1], [0], [0], [1], [0, 0, 1, 1], [], []>} : vector<32x128xf32>, vector<128x8xf32>, vector<32x8xf32> -> vector<32x8xf32>
    %81 = arith.addf %75, %80 : vector<32x8xf32>
    %c0_68 = arith.constant 0 : index
    %c3_69 = arith.constant 3 : index
    %c0_70 = arith.constant 0 : index
    %c0_71 = arith.constant 0 : index
    %82 = vector.load %arg5[%c0_68, %c3_69, %c0_70, %c0_71] : memref<1x10x8x128xf32, #tpu.memory_space<vmem>>, vector<1x4x8x128xf32>
    %83 = vector.shape_cast %82 : vector<1x4x8x128xf32> to vector<32x128xf32>
    %c3_72 = arith.constant 3 : index
    %c0_73 = arith.constant 0 : index
    %c0_74 = arith.constant 0 : index
    %84 = vector.load %arg2[%c3_72, %c0_73, %c0_74] : memref<7x128x8xf32, #tpu.memory_space<vmem>>, vector<1x128x8xf32>
    %85 = vector.shape_cast %84 : vector<1x128x8xf32> to vector<128x8xf32>
    %cst_75 = arith.constant dense<0.000000e+00> : vector<32x8xf32>
    %86 = tpu.matmul %83, %85, %cst_75 {dimension_numbers = #tpu.dot_dimension_numbers<[1], [0], [0], [1], [0, 0, 1, 1], [], []>} : vector<32x128xf32>, vector<128x8xf32>, vector<32x8xf32> -> vector<32x8xf32>
    %87 = arith.addf %81, %86 : vector<32x8xf32>
    %c0_76 = arith.constant 0 : index
    %c4 = arith.constant 4 : index
    %c0_77 = arith.constant 0 : index
    %c0_78 = arith.constant 0 : index
    %88 = vector.load %arg5[%c0_76, %c4, %c0_77, %c0_78] : memref<1x10x8x128xf32, #tpu.memory_space<vmem>>, vector<1x4x8x128xf32>
    %89 = vector.shape_cast %88 : vector<1x4x8x128xf32> to vector<32x128xf32>
    %c4_79 = arith.constant 4 : index
    %c0_80 = arith.constant 0 : index
    %c0_81 = arith.constant 0 : index
    %90 = vector.load %arg2[%c4_79, %c0_80, %c0_81] : memref<7x128x8xf32, #tpu.memory_space<vmem>>, vector<1x128x8xf32>
    %91 = vector.shape_cast %90 : vector<1x128x8xf32> to vector<128x8xf32>
    %cst_82 = arith.constant dense<0.000000e+00> : vector<32x8xf32>
    %92 = tpu.matmul %89, %91, %cst_82 {dimension_numbers = #tpu.dot_dimension_numbers<[1], [0], [0], [1], [0, 0, 1, 1], [], []>} : vector<32x128xf32>, vector<128x8xf32>, vector<32x8xf32> -> vector<32x8xf32>
    %93 = arith.addf %87, %92 : vector<32x8xf32>
    %c0_83 = arith.constant 0 : index
    %c5 = arith.constant 5 : index
    %c0_84 = arith.constant 0 : index
    %c0_85 = arith.constant 0 : index
    %94 = vector.load %arg5[%c0_83, %c5, %c0_84, %c0_85] : memref<1x10x8x128xf32, #tpu.memory_space<vmem>>, vector<1x4x8x128xf32>
    %95 = vector.shape_cast %94 : vector<1x4x8x128xf32> to vector<32x128xf32>
    %c5_86 = arith.constant 5 : index
    %c0_87 = arith.constant 0 : index
    %c0_88 = arith.constant 0 : index
    %96 = vector.load %arg2[%c5_86, %c0_87, %c0_88] : memref<7x128x8xf32, #tpu.memory_space<vmem>>, vector<1x128x8xf32>
    %97 = vector.shape_cast %96 : vector<1x128x8xf32> to vector<128x8xf32>
    %cst_89 = arith.constant dense<0.000000e+00> : vector<32x8xf32>
    %98 = tpu.matmul %95, %97, %cst_89 {dimension_numbers = #tpu.dot_dimension_numbers<[1], [0], [0], [1], [0, 0, 1, 1], [], []>} : vector<32x128xf32>, vector<128x8xf32>, vector<32x8xf32> -> vector<32x8xf32>
    %99 = arith.addf %93, %98 : vector<32x8xf32>
    %c0_90 = arith.constant 0 : index
    %c6 = arith.constant 6 : index
    %c0_91 = arith.constant 0 : index
    %c0_92 = arith.constant 0 : index
    %100 = vector.load %arg5[%c0_90, %c6, %c0_91, %c0_92] : memref<1x10x8x128xf32, #tpu.memory_space<vmem>>, vector<1x4x8x128xf32>
    %101 = vector.shape_cast %100 : vector<1x4x8x128xf32> to vector<32x128xf32>
    %c6_93 = arith.constant 6 : index
    %c0_94 = arith.constant 0 : index
    %c0_95 = arith.constant 0 : index
    %102 = vector.load %arg2[%c6_93, %c0_94, %c0_95] : memref<7x128x8xf32, #tpu.memory_space<vmem>>, vector<1x128x8xf32>
    %103 = vector.shape_cast %102 : vector<1x128x8xf32> to vector<128x8xf32>
    %cst_96 = arith.constant dense<0.000000e+00> : vector<32x8xf32>
    %104 = tpu.matmul %101, %103, %cst_96 {dimension_numbers = #tpu.dot_dimension_numbers<[1], [0], [0], [1], [0, 0, 1, 1], [], []>} : vector<32x128xf32>, vector<128x8xf32>, vector<32x8xf32> -> vector<32x8xf32>
    %105 = arith.addf %99, %104 : vector<32x8xf32>
    %c0_97 = arith.constant 0 : index
    %106 = memref.load %arg3[%c0_97] : memref<1xf32, #tpu.memory_space<smem>>
    %107 = vector.broadcast %106 : f32 to vector<32x8xf32>
    %108 = arith.addf %105, %107 : vector<32x8xf32>
    %cst_98 = arith.constant 0.000000e+00 : f32
    %109 = vector.broadcast %cst_98 : f32 to vector<32x8xf32>
    %110 = arith.subf %109, %108 : vector<32x8xf32>
    %111 = math.exp %110 : vector<32x8xf32>
    %cst_99 = arith.constant 1.000000e+00 : f32
    %112 = vector.broadcast %cst_99 : f32 to vector<32x8xf32>
    %113 = arith.addf %112, %111 : vector<32x8xf32>
    %cst_100 = arith.constant 1.000000e+00 : f32
    %114 = vector.broadcast %cst_100 : f32 to vector<32x8xf32>
    %115 = arith.divf %114, %113 : vector<32x8xf32>
    %116 = tpu.iota {dimensions = array<i32: 1>} : vector<8x128xi32>
    %117 = tpu.iota {dimensions = array<i32: 0>} : vector<8x128xi32>
    %c16_i32 = arith.constant 16 : i32
    %118 = vector.broadcast %c16_i32 : i32 to vector<8x128xi32>
    %119 = arith.muli %117, %118 : vector<8x128xi32>
    %120 = arith.cmpi sge, %116, %119 : vector<8x128xi32>
    %c16_i32_101 = arith.constant 16 : i32
    %121 = vector.broadcast %c16_i32_101 : i32 to vector<8x128xi32>
    %122 = arith.muli %117, %121 : vector<8x128xi32>
    %c16_i32_102 = arith.constant 16 : i32
    %123 = vector.broadcast %c16_i32_102 : i32 to vector<8x128xi32>
    %124 = arith.addi %122, %123 : vector<8x128xi32>
    %125 = arith.cmpi slt, %116, %124 : vector<8x128xi32>
    %126 = arith.andi %120, %125 : vector<8x128xi1>
    %cst_103 = arith.constant 1.000000e+00 : f32
    %cst_104 = arith.constant 0.000000e+00 : f32
    %127 = vector.broadcast %cst_103 : f32 to vector<8x128xf32>
    %128 = vector.broadcast %cst_104 : f32 to vector<8x128xf32>
    %129 = arith.select %126, %127, %128 : vector<8x128xi1>, vector<8x128xf32>
    %cst_105 = arith.constant dense<0.000000e+00> : vector<32x128xf32>
    %130 = tpu.matmul %115, %129, %cst_105 {dimension_numbers = #tpu.dot_dimension_numbers<[1], [0], [0], [1], [0, 0, 1, 1], [], []>} : vector<32x8xf32>, vector<8x128xf32>, vector<32x128xf32> -> vector<32x128xf32>
    %131 = vector.shape_cast %130 : vector<32x128xf32> to vector<1x4x8x128xf32>
    %c0_106 = arith.constant 0 : index
    %c0_107 = arith.constant 0 : index
    %c0_108 = arith.constant 0 : index
    %c0_109 = arith.constant 0 : index
    %132 = vector.load %arg1[%c0_106, %c0_107, %c0_108, %c0_109] : memref<1x4x8x128xf32, #tpu.memory_space<vmem>>, vector<1x4x8x128xf32>
    %133 = arith.mulf %132, %131 : vector<1x4x8x128xf32>
    %c0_110 = arith.constant 0 : index
    %c0_111 = arith.constant 0 : index
    %c0_112 = arith.constant 0 : index
    %c0_113 = arith.constant 0 : index
    %134 = vector.load %arg4[%c0_110, %c0_111, %c0_112, %c0_113] : memref<1x4x8x128xf32, #tpu.memory_space<vmem>>, vector<1x4x8x128xf32>
    tpu.vector_store %arg4[%c0_110, %c0_111, %c0_112, %c0_113], %133 {strides = array<i32>} : memref<1x4x8x128xf32, #tpu.memory_space<vmem>>, vector<1x4x8x128xf32>,
    return
  }
  func.func @transform_0(%arg0: i32) -> (i32, i32, i32, i32) {
    %c0_i32 = arith.constant 0 : i32
    %c0_i32_0 = arith.constant 0 : i32
    %c0_i32_1 = arith.constant 0 : i32
    %c0_i32_2 = arith.constant 0 : i32
    return %arg0, %c0_i32, %c0_i32_0, %c0_i32_1 : i32, i32, i32, i32
  }
  func.func @transform_1(%arg0: i32) -> (i32, i32, i32) {
    %c0_i32 = arith.constant 0 : i32
    %c0_i32_0 = arith.constant 0 : i32
    %c0_i32_1 = arith.constant 0 : i32
    %c0_i32_2 = arith.constant 0 : i32
    return %c0_i32, %c0_i32_0, %c0_i32_1 : i32, i32, i32
  }
  func.func @transform_2(%arg0: i32) -> i32 {
    %c0_i32 = arith.constant 0 : i32
    %c0_i32_0 = arith.constant 0 : i32
    return %c0_i32 : i32
  }
  func.func @transform_3(%arg0: i32) -> (i32, i32, i32, i32) {
    %c0_i32 = arith.constant 0 : i32
    %c0_i32_0 = arith.constant 0 : i32
    %c0_i32_1 = arith.constant 0 : i32
    %c0_i32_2 = arith.constant 0 : i32
    return %arg0, %c0_i32, %c0_i32_0, %c0_i32_1 : i32, i32, i32, i32
  }
}

</mosaic_0001>

<llo_original>
// kernel: spatial_att.1
$region0: #{spatial_att.1}
  #allocation0 [shape = 'u32[]', space=smem, size = 0x4, offset = 0x4, fixed_abs, tag = 'smem constant byte address 0x4 - core index']
  #allocation1 [shape = 'u32[144,128]{1,0:T(1,128)}', space=vmem, size = 0x12000, scoped, tag = 'internal scratch']
  #allocation2 [shape = 'f32[1,10,8,128]{3,2,1,0:T(8,128)}', space=vmem, size = 0xa000, scoped, tag = 'scratch operand']
  #allocation3 [shape = 'f32[1]{0:T(128)S(6)}', space=smem, size = 0x200, scoped, tag = 'scoped memory for spatial_att.1']
  %s0 = inlined_call_operand.vmem [shape: f32[2,4,8,128], index: 0, kind: input, shape index: {}]
  %s1 = inlined_call_operand.vmem [shape: f32[7,128,8], index: 1, kind: input, shape index: {}]
  %s2 = inlined_call_operand.<no memory space> [shape: f32[1], index: 2, kind: input, shape index: {}]
  %s3 = inlined_call_operand.vmem [shape: f32[2,4,8,128], index: 3, kind: output, shape index: {}]
  %s4 = sld [smem:[#allocation0]]
  $region45: #{spatial_att.1} parent=0
    _
  %s6 = ssub.s32 1, %s4
  %s7 = scalar_select 0, %s6, %s4
  %8 = sst [smem:[#allocation3]] %s2
  loop: start=0, step=1, limit=4
  $region2: #{spatial_att.1} parent=0 // loop_pre_header
    _
  $region3: #{spatial_att.1} parent=0 // loop_header
    %s10 = sphi 0, %s14
    %p11 = scmp.ge.s32.totalorder %s10, 4
    %s20 = sphi 0, %s22
    %s23 = sphi 0, %s20
    %s24 = sphi 0, %s23
    %s40 = sphi 0, %s24
    %s44 = sphi 0, %s44
    %s46 = sphi 0, %s44
    %s47 = sphi 0, %s46
    %s61 = sphi 0, %s47
    %s65 = sphi 0, %s65
    %s67 = sphi 0, %s65
    %s68 = sphi 0, %s67
    %s82 = sphi 0, %s68
    %s88 = sphi 0, %s90
    %s91 = sphi 0, %s88
    %s92 = sphi 0, %s91
    %s108 = sphi 0, %s92
  $region4: #{spatial_att.1} parent=0 // loop_header_branch
    %13 = sbr.rel (%p11) target = $region8
  $region5: #{spatial_att.1} parent=0 // loop_body
    %s15 = ssub.s32 %s10, 1
    %s16 = ssub.s32 %s10, 2
    %s17 = sadd.s32 %s10, 1
    %s18 = ssub.s32 %s10, %s17
    %p19 = scmp.eq.s32.totalorder %s18, 0
    %s21 = sadd.s32 %s20, 1
    %s22 = scalar_select %p19, %s20, %s21
    %p25 = pneg %p19
    %p26 = scmp.eq.s32.totalorder %s10, 1
    %p27 = por %p25, %p26
    %p28 = scmp.ne.s32.totalorder %s20, %s23
    %p29 = scmp.eq.s32.totalorder %s10, 0
    %p30 = por %p28, %p29
    %p31 = scmp.ne.s32.totalorder %s20, %s23
    %p32 = scmp.eq.s32.totalorder %s15, 1
    %p33 = por %p31, %p32
    %p34 = scmp.ne.s32.totalorder %s23, %s24
    %p35 = scmp.eq.s32.totalorder %s15, 0
    %p36 = por %p34, %p35
    %p37 = scmp.ne.s32.totalorder %s23, %s24
    %p38 = scmp.eq.s32.totalorder %s16, 1
    %p39 = por %p37, %p38
    %p41 = scmp.ne.s32.totalorder %s24, %s40
    %p42 = scmp.eq.s32.totalorder %s16, 0
    %p43 = por %p41, %p42
    %s45 = sadd.s32 %s44, 1
    %p48 = scmp.eq.s32.totalorder %s10, 1
    %p49 = scmp.ne.s32.totalorder %s44, %s46
    %p50 = scmp.eq.s32.totalorder %s10, 0
    %p51 = por %p49, %p50
    %p52 = scmp.ne.s32.totalorder %s44, %s46
    %p53 = scmp.eq.s32.totalorder %s15, 1
    %p54 = por %p52, %p53
    %p55 = scmp.ne.s32.totalorder %s46, %s47
    %p56 = scmp.eq.s32.totalorder %s15, 0
    %p57 = por %p55, %p56
    %p58 = scmp.ne.s32.totalorder %s46, %s47
    %p59 = scmp.eq.s32.totalorder %s16, 1
    %p60 = por %p58, %p59
    %p62 = scmp.ne.s32.totalorder %s47, %s61
    %p63 = scmp.eq.s32.totalorder %s16, 0
    %p64 = por %p62, %p63
    %s66 = sadd.s32 %s65, 1
    %p69 = scmp.eq.s32.totalorder %s10, 1
    %p70 = scmp.ne.s32.totalorder %s65, %s67
    %p71 = scmp.eq.s32.totalorder %s10, 0
    %p72 = por %p70, %p71
    %p73 = scmp.ne.s32.totalorder %s65, %s67
    %p74 = scmp.eq.s32.totalorder %s15, 1
    %p75 = por %p73, %p74
    %p76 = scmp.ne.s32.totalorder %s67, %s68
    %p77 = scmp.eq.s32.totalorder %s15, 0
    %p78 = por %p76, %p77
    %p79 = scmp.ne.s32.totalorder %s67, %s68
    %p80 = scmp.eq.s32.totalorder %s16, 1
    %p81 = por %p79, %p80
    %p83 = scmp.ne.s32.totalorder %s68, %s82
    %p84 = scmp.eq.s32.totalorder %s16, 0
    %p85 = por %p83, %p84
    %s86 = ssub.s32 %s10, %s17
    %p87 = scmp.eq.s32.totalorder %s86, 0
    %s89 = sadd.s32 %s88, 1
    %s90 = scalar_select %p87, %s88, %s89
    %p93 = pneg %p87
    %p94 = scmp.eq.s32.totalorder %s10, 1
    %p95 = por %p93, %p94
    %p96 = scmp.ne.s32.totalorder %s88, %s91
    %p97 = scmp.eq.s32.totalorder %s10, 0
    %p98 = por %p96, %p97
    %p99 = scmp.ne.s32.totalorder %s88, %s91
    %p100 = scmp.eq.s32.totalorder %s15, 1
    %p101 = por %p99, %p100
    %p102 = scmp.ne.s32.totalorder %s91, %s92
    %p103 = scmp.eq.s32.totalorder %s15, 0
    %p104 = por %p102, %p103
    %p105 = scmp.ne.s32.totalorder %s91, %s92
    %p106 = scmp.eq.s32.totalorder %s16, 1
    %p107 = por %p105, %p106
    %p109 = scmp.ne.s32.totalorder %s92, %s108
    %p110 = scmp.eq.s32.totalorder %s16, 0
    %p111 = por %p109, %p110
    %p112 = scmp.le.s32.totalorder 1, %s10
    %p113 = scmp.lt.s32.totalorder %s10, 3
    %p114 = pnand %p112, %p113
    %p115 = pneg %p114
    // Predicated region
    $region9: #{spatial_att.1} parent=5 // pred_check
      _
    $region10: #{spatial_att.1} parent=5 // pred_check_branch
      %117 = sbr.rel (%p114) target = $region12
    $region11: #{spatial_att.1} parent=5 // pred_region
      %s118 = ssub.s32 %s10, 1
      // Predicated region
      $region13: #{spatial_att.1} parent=11 // pred_check
        %p119 = pneg %p57
      $region14: #{spatial_att.1} parent=11 // pred_check_branch
        %121 = sbr.rel (%p119) target = $region16
      $region15: #{spatial_att.1} parent=11 // pred_region
        _
      $region16: #{spatial_att.1} parent=11 // pred_fallthru
        _
      // Predicated region
      $region17: #{spatial_att.1} parent=11 // pred_check
        %p122 = pneg %p78
      $region18: #{spatial_att.1} parent=11 // pred_check_branch
        %124 = sbr.rel (%p122) target = $region20
      $region19: #{spatial_att.1} parent=11 // pred_region
        _
      $region20: #{spatial_att.1} parent=11 // pred_fallthru
        _
    $region12: #{spatial_att.1} parent=5 // pred_fallthru
      _
    %p125 = scmp.lt.s32.totalorder %s10, 2
    // Predicated region
    $region21: #{spatial_att.1} parent=5 // pred_check
      %p126 = pneg %p125
    $region22: #{spatial_att.1} parent=5 // pred_check_branch
      %128 = sbr.rel (%p126) target = $region24
    $region23: #{spatial_att.1} parent=5 // pred_region
      // Predicated region
      $region25: #{spatial_att.1} parent=23 // pred_check
        %p129 = pneg %p30
      $region26: #{spatial_att.1} parent=23 // pred_check_branch
        %131 = sbr.rel (%p129) target = $region28
      $region27: #{spatial_att.1} parent=23 // pred_region
        %p132 = scmp.lt.s32.totalorder %s10, 1
        %s133 = scalar_select %p132, %s10, 1
        %s134 = smul.addr %s133, 4
        %s135 = smul.addr %s134, 8
        %s136 = scalar_lea.vmem %s0, %s135
      $region28: #{spatial_att.1} parent=23 // pred_fallthru
        _
    $region24: #{spatial_att.1} parent=5 // pred_fallthru
      _
    %p137 = scmp.le.s32.totalorder 1, %s10
    %p138 = scmp.lt.s32.totalorder %s10, 3
    %p139 = pnand %p137, %p138
    %p140 = pneg %p139
    // Predicated region
    $region29: #{spatial_att.1} parent=5 // pred_check
      _
    $region30: #{spatial_att.1} parent=5 // pred_check_branch
      %142 = sbr.rel (%p139) target = $region32
    $region31: #{spatial_att.1} parent=5 // pred_region
      %s143 = ssub.s32 %s10, 1
      %p144 = scmp.lt.s32.totalorder %s15, 1
      %s145 = scalar_select %p144, %s15, 1
      %s146 = smul.addr %s145, 4
      %s147 = smul.addr %s146, 8
      %s148 = scalar_lea.vmem %s0, %s147
      %p149 = pneg %p36
      %p150 = pneg %p33
      %p151 = pneg %p57
      %p152 = pneg %p54
      %p153 = pneg %p78
      %p154 = pneg %p75
      %p155 = pneg %p104
      %p156 = pneg %p101
      %p157 = scmp.lt.s32.totalorder %s15, 1
      %s158 = scalar_select %p157, %s15, 1
      %s159 = smul.addr %s158, 4
      %s160 = smul.addr %s159, 8
      %s161 = scalar_lea.vmem %s3, %s160
      %p162 = scmp.lt.s32.totalorder %s15, 1
      %s163 = scalar_select %p162, %s15, 1
      %s164 = smul.addr %s163, 4
      %s165 = smul.addr %s164, 8
      %s166 = scalar_lea.vmem %s0, %s165
      %p167 = scmp.lt.s32.totalorder %s15, 1
      %s168 = scalar_select %p167, %s15, 1
      %s169 = smul.addr %s168, 4
      %s170 = smul.addr %s169, 8
      %s171 = scalar_lea.vmem %s3, %s170
      %v172 = vld [vmem:[%s166] sm:$0xff]
      %v173 = vld [vmem:[%s166 + $0x8] sm:$0xff]
      %v174 = vld [vmem:[%s166 + $0x10] sm:$0xff]
      %v175 = vld [vmem:[%s166 + $0x18] sm:$0xff]
      %vm176 = vcmask 130048
      %v177 = vsel %vm176, %v172, -inf
      %178 = vmax.xlane.f32.xlu0 %v177
      %v179 = vpop.xlane.xlu0 %178
      %v180 = vsel %vm176, %v173, -inf
      %181 = vmax.xlane.f32.xlu0 %v180
      %v182 = vpop.xlane.xlu0 %181
      %v183 = vsel %vm176, %v174, -inf
      %184 = vmax.xlane.f32.xlu0 %v183
      %v185 = vpop.xlane.xlu0 %184
      %v186 = vsel %vm176, %v175, -inf
      %187 = vmax.xlane.f32.xlu0 %v186
      %v188 = vpop.xlane.xlu0 %187
      %v189 = vsel %vm176, %v172, 0.0
      %190 = vadd.xlane.f32.xlu0 %v189
      %v191 = vpop.xlane.xlu0 %190
      %v192 = vsel %vm176, %v173, 0.0
      %193 = vadd.xlane.f32.xlu0 %v192
      %v194 = vpop.xlane.xlu0 %193
      %v195 = vsel %vm176, %v174, 0.0
      %196 = vadd.xlane.f32.xlu0 %v195
      %v197 = vpop.xlane.xlu0 %196
      %v198 = vsel %vm176, %v175, 0.0
      %199 = vadd.xlane.f32.xlu0 %v198
      %v200 = vpop.xlane.xlu0 %199
      %vm201 = vcmask 261248
      %v202 = vsel %vm201, %v172, -inf
      %203 = vmax.xlane.f32.xlu0 %v202
      %v204 = vpop.xlane.xlu0 %203
      %v205 = vsel %vm201, %v173, -inf
      %206 = vmax.xlane.f32.xlu0 %v205
      %v207 = vpop.xlane.xlu0 %206
      %v208 = vsel %vm201, %v174, -inf
      %209 = vmax.xlane.f32.xlu0 %v208
      %v210 = vpop.xlane.xlu0 %209
      %v211 = vsel %vm201, %v175, -inf
      %212 = vmax.xlane.f32.xlu0 %v211
      %v213 = vpop.xlane.xlu0 %212
      %218 = vrot.lane.b32.xlu0 %v172, 112
      %v219 = vpop.permute.xlu0 %218
      %220 = vrot.lane.b32.xlu0 %v173, 112
      %v221 = vpop.permute.xlu0 %220
      %222 = vrot.lane.b32.xlu0 %v174, 112
      %v223 = vpop.permute.xlu0 %222
      %224 = vrot.lane.b32.xlu0 %v175, 112
      %v225 = vpop.permute.xlu0 %224
      %v230 = vsel %vm176, %v219, 0.0
      %231 = vadd.xlane.f32.xlu0 %v230
      %v232 = vpop.xlane.xlu0 %231
      %v233 = vsel %vm176, %v221, 0.0
      %234 = vadd.xlane.f32.xlu0 %v233
      %v235 = vpop.xlane.xlu0 %234
      %v236 = vsel %vm176, %v223, 0.0
      %237 = vadd.xlane.f32.xlu0 %v236
      %v238 = vpop.xlane.xlu0 %237
      %v239 = vsel %vm176, %v225, 0.0
      %240 = vadd.xlane.f32.xlu0 %v239
      %v241 = vpop.xlane.xlu0 %240
      %vm242 = vcmask 392448
      %v243 = vsel %vm242, %v172, -inf
      %244 = vmax.xlane.f32.xlu0 %v243
      %v245 = vpop.xlane.xlu0 %244
      %v246 = vsel %vm242, %v173, -inf
      %247 = vmax.xlane.f32.xlu0 %v246
      %v248 = vpop.xlane.xlu0 %247
      %v249 = vsel %vm242, %v174, -inf
      %250 = vmax.xlane.f32.xlu0 %v249
      %v251 = vpop.xlane.xlu0 %250
      %v252 = vsel %vm242, %v175, -inf
      %253 = vmax.xlane.f32.xlu0 %v252
      %v254 = vpop.xlane.xlu0 %253
      %255 = vrot.lane.b32.xlu0 %v172, 96
      %v256 = vpop.permute.xlu0 %255
      %257 = vrot.lane.b32.xlu0 %v173, 96
      %v258 = vpop.permute.xlu0 %257
      %259 = vrot.lane.b32.xlu0 %v174, 96
      %v260 = vpop.permute.xlu0 %259
      %261 = vrot.lane.b32.xlu0 %v175, 96
      %v262 = vpop.permute.xlu0 %261
      %v267 = vsel %vm176, %v256, 0.0
      %268 = vadd.xlane.f32.xlu0 %v267
      %v269 = vpop.xlane.xlu0 %268
      %v270 = vsel %vm176, %v258, 0.0
      %271 = vadd.xlane.f32.xlu0 %v270
      %v272 = vpop.xlane.xlu0 %271
      %v273 = vsel %vm176, %v260, 0.0
      %274 = vadd.xlane.f32.xlu0 %v273
      %v275 = vpop.xlane.xlu0 %274
      %v276 = vsel %vm176, %v262, 0.0
      %277 = vadd.xlane.f32.xlu0 %v276
      %v278 = vpop.xlane.xlu0 %277
      %vm279 = vcmask 523648
      %v280 = vsel %vm279, %v172, -inf
      %281 = vmax.xlane.f32.xlu0 %v280
      %v282 = vpop.xlane.xlu0 %281
      %v283 = vsel %vm279, %v173, -inf
      %284 = vmax.xlane.f32.xlu0 %v283
      %v285 = vpop.xlane.xlu0 %284
      %v286 = vsel %vm279, %v174, -inf
      %287 = vmax.xlane.f32.xlu0 %v286
      %v288 = vpop.xlane.xlu0 %287
      %v289 = vsel %vm279, %v175, -inf
      %290 = vmax.xlane.f32.xlu0 %v289
      %v291 = vpop.xlane.xlu0 %290
      %292 = vrot.lane.b32.xlu0 %v172, 80
      %v293 = vpop.permute.xlu0 %292
      %294 = vrot.lane.b32.xlu0 %v173, 80
      %v295 = vpop.permute.xlu0 %294
      %296 = vrot.lane.b32.xlu0 %v174, 80
      %v297 = vpop.permute.xlu0 %296
      %298 = vrot.lane.b32.xlu0 %v175, 80
      %v299 = vpop.permute.xlu0 %298
      %v304 = vsel %vm176, %v293, 0.0
      %305 = vadd.xlane.f32.xlu0 %v304
      %v306 = vpop.xlane.xlu0 %305
      %v307 = vsel %vm176, %v295, 0.0
      %308 = vadd.xlane.f32.xlu0 %v307
      %v309 = vpop.xlane.xlu0 %308
      %v310 = vsel %vm176, %v297, 0.0
      %311 = vadd.xlane.f32.xlu0 %v310
      %v312 = vpop.xlane.xlu0 %311
      %v313 = vsel %vm176, %v299, 0.0
      %314 = vadd.xlane.f32.xlu0 %v313
      %v315 = vpop.xlane.xlu0 %314
      %vm316 = vcmask 654848
      %v317 = vsel %vm316, %v172, -inf
      %318 = vmax.xlane.f32.xlu0 %v317
      %v319 = vpop.xlane.xlu0 %318
      %v320 = vsel %vm316, %v173, -inf
      %321 = vmax.xlane.f32.xlu0 %v320
      %v322 = vpop.xlane.xlu0 %321
      %v323 = vsel %vm316, %v174, -inf
      %324 = vmax.xlane.f32.xlu0 %v323
      %v325 = vpop.xlane.xlu0 %324
      %v326 = vsel %vm316, %v175, -inf
      %327 = vmax.xlane.f32.xlu0 %v326
      %v328 = vpop.xlane.xlu0 %327
      %329 = vrot.lane.b32.xlu0 %v172, 64
      %v330 = vpop.permute.xlu0 %329
      %331 = vrot.lane.b32.xlu0 %v173, 64
      %v332 = vpop.permute.xlu0 %331
      %333 = vrot.lane.b32.xlu0 %v174, 64
      %v334 = vpop.permute.xlu0 %333
      %335 = vrot.lane.b32.xlu0 %v175, 64
      %v336 = vpop.permute.xlu0 %335
      %v341 = vsel %vm176, %v330, 0.0
      %342 = vadd.xlane.f32.xlu0 %v341
      %v343 = vpop.xlane.xlu0 %342
      %v344 = vsel %vm176, %v332, 0.0
      %345 = vadd.xlane.f32.xlu0 %v344
      %v346 = vpop.xlane.xlu0 %345
      %v347 = vsel %vm176, %v334, 0.0
      %348 = vadd.xlane.f32.xlu0 %v347
      %v349 = vpop.xlane.xlu0 %348
      %v350 = vsel %vm176, %v336, 0.0
      %351 = vadd.xlane.f32.xlu0 %v350
      %v352 = vpop.xlane.xlu0 %351
      %vm353 = vcmask 786048
      %v354 = vsel %vm353, %v172, -inf
      %355 = vmax.xlane.f32.xlu0 %v354
      %v356 = vpop.xlane.xlu0 %355
      %v357 = vsel %vm353, %v173, -inf
      %358 = vmax.xlane.f32.xlu0 %v357
      %v359 = vpop.xlane.xlu0 %358
      %v360 = vsel %vm353, %v174, -inf
      %361 = vmax.xlane.f32.xlu0 %v360
      %v362 = vpop.xlane.xlu0 %361
      %v363 = vsel %vm353, %v175, -inf
      %364 = vmax.xlane.f32.xlu0 %v363
      %v365 = vpop.xlane.xlu0 %364
      %366 = vrot.lane.b32.xlu0 %v172, 48
      %v367 = vpop.permute.xlu0 %366
      %368 = vrot.lane.b32.xlu0 %v173, 48
      %v369 = vpop.permute.xlu0 %368
      %370 = vrot.lane.b32.xlu0 %v174, 48
      %v371 = vpop.permute.xlu0 %370
      %372 = vrot.lane.b32.xlu0 %v175, 48
      %v373 = vpop.permute.xlu0 %372
      %v378 = vsel %vm176, %v367, 0.0
      %379 = vadd.xlane.f32.xlu0 %v378
      %v380 = vpop.xlane.xlu0 %379
      %v381 = vsel %vm176, %v369, 0.0
      %382 = vadd.xlane.f32.xlu0 %v381
      %v383 = vpop.xlane.xlu0 %382
      %v384 = vsel %vm176, %v371, 0.0
      %385 = vadd.xlane.f32.xlu0 %v384
      %v386 = vpop.xlane.xlu0 %385
      %v387 = vsel %vm176, %v373, 0.0
      %388 = vadd.xlane.f32.xlu0 %v387
      %v389 = vpop.xlane.xlu0 %388
      %vm390 = vcmask 917248
      %v391 = vsel %vm390, %v172, -inf
      %392 = vmax.xlane.f32.xlu0 %v391
      %v393 = vpop.xlane.xlu0 %392
      %v394 = vsel %vm390, %v173, -inf
      %395 = vmax.xlane.f32.xlu0 %v394
      %v396 = vpop.xlane.xlu0 %395
      %v397 = vsel %vm390, %v174, -inf
      %398 = vmax.xlane.f32.xlu0 %v397
      %v399 = vpop.xlane.xlu0 %398
      %v400 = vsel %vm390, %v175, -inf
      %401 = vmax.xlane.f32.xlu0 %v400
      %v402 = vpop.xlane.xlu0 %401
      %403 = vrot.lane.b32.xlu0 %v172, 32
      %v404 = vpop.permute.xlu0 %403
      %405 = vrot.lane.b32.xlu0 %v173, 32
      %v406 = vpop.permute.xlu0 %405
      %407 = vrot.lane.b32.xlu0 %v174, 32
      %v408 = vpop.permute.xlu0 %407
      %409 = vrot.lane.b32.xlu0 %v175, 32
      %v410 = vpop.permute.xlu0 %409
      %v415 = vsel %vm176, %v404, 0.0
      %416 = vadd.xlane.f32.xlu0 %v415
      %v417 = vpop.xlane.xlu0 %416
      %v418 = vsel %vm176, %v406, 0.0
      %419 = vadd.xlane.f32.xlu0 %v418
      %v420 = vpop.xlane.xlu0 %419
      %v421 = vsel %vm176, %v408, 0.0
      %422 = vadd.xlane.f32.xlu0 %v421
      %v423 = vpop.xlane.xlu0 %422
      %v424 = vsel %vm176, %v410, 0.0
      %425 = vadd.xlane.f32.xlu0 %v424
      %v426 = vpop.xlane.xlu0 %425
      %vm427 = vcmask 1048448
      %v428 = vsel %vm427, %v172, -inf
      %429 = vmax.xlane.f32.xlu0 %v428
      %v430 = vpop.xlane.xlu0 %429
      %v431 = vsel %vm427, %v173, -inf
      %432 = vmax.xlane.f32.xlu0 %v431
      %v433 = vpop.xlane.xlu0 %432
      %v434 = vsel %vm427, %v174, -inf
      %435 = vmax.xlane.f32.xlu0 %v434
      %v436 = vpop.xlane.xlu0 %435
      %v437 = vsel %vm427, %v175, -inf
      %438 = vmax.xlane.f32.xlu0 %v437
      %v439 = vpop.xlane.xlu0 %438
      %440 = vrot.lane.b32.xlu0 %v172, 16
      %v441 = vpop.permute.xlu0 %440
      %442 = vrot.lane.b32.xlu0 %v173, 16
      %v443 = vpop.permute.xlu0 %442
      %444 = vrot.lane.b32.xlu0 %v174, 16
      %v445 = vpop.permute.xlu0 %444
      %446 = vrot.lane.b32.xlu0 %v175, 16
      %v447 = vpop.permute.xlu0 %446
      %v452 = vsel %vm176, %v441, 0.0
      %453 = vadd.xlane.f32.xlu0 %v452
      %v454 = vpop.xlane.xlu0 %453
      %v455 = vsel %vm176, %v443, 0.0
      %456 = vadd.xlane.f32.xlu0 %v455
      %v457 = vpop.xlane.xlu0 %456
      %v458 = vsel %vm176, %v445, 0.0
      %459 = vadd.xlane.f32.xlu0 %v458
      %v460 = vpop.xlane.xlu0 %459
      %v461 = vsel %vm176, %v447, 0.0
      %462 = vadd.xlane.f32.xlu0 %v461
      %v463 = vpop.xlane.xlu0 %462
      %vm464 = vcmask 7168
      %v465 = vsel %vm464, %v179, %v204
      %v466 = vsel %vm464, %v182, %v207
      %v467 = vsel %vm464, %v185, %v210
      %v468 = vsel %vm464, %v188, %v213
      %vm469 = vcmask 15360
      %v470 = vsel %vm469, %v465, %v245
      %v471 = vsel %vm469, %v466, %v248
      %v472 = vsel %vm469, %v467, %v251
      %v473 = vsel %vm469, %v468, %v254
      %vm474 = vcmask 23552
      %v475 = vsel %vm474, %v470, %v282
      %v476 = vsel %vm474, %v471, %v285
      %v477 = vsel %vm474, %v472, %v288
      %v478 = vsel %vm474, %v473, %v291
      %vm479 = vcmask 31744
      %v480 = vsel %vm479, %v475, %v319
      %v481 = vsel %vm479, %v476, %v322
      %v482 = vsel %vm479, %v477, %v325
      %v483 = vsel %vm479, %v478, %v328
      %vm484 = vcmask 39936
      %v485 = vsel %vm484, %v480, %v356
      %v486 = vsel %vm484, %v481, %v359
      %v487 = vsel %vm484, %v482, %v362
      %v488 = vsel %vm484, %v483, %v365
      %vm489 = vcmask 48128
      %v490 = vsel %vm489, %v485, %v393
      %v491 = vsel %vm489, %v486, %v396
      %v492 = vsel %vm489, %v487, %v399
      %v493 = vsel %vm489, %v488, %v402
      %vm494 = vcmask 56320
      %v495 = vsel %vm494, %v490, %v430
      %v496 = vsel %vm494, %v491, %v433
      %v497 = vsel %vm494, %v492, %v436
      %v498 = vsel %vm494, %v493, %v439
      %v499 = vsel %vm464, %v191, %v232
      %v500 = vsel %vm464, %v194, %v235
      %v501 = vsel %vm464, %v197, %v238
      %v502 = vsel %vm464, %v200, %v241
      %v503 = vsel %vm469, %v499, %v269
      %v504 = vsel %vm469, %v500, %v272
      %v505 = vsel %vm469, %v501, %v275
      %v506 = vsel %vm469, %v502, %v278
      %v507 = vsel %vm474, %v503, %v306
      %v508 = vsel %vm474, %v504, %v309
      %v509 = vsel %vm474, %v505, %v312
      %v510 = vsel %vm474, %v506, %v315
      %v511 = vsel %vm479, %v507, %v343
      %v512 = vsel %vm479, %v508, %v346
      %v513 = vsel %vm479, %v509, %v349
      %v514 = vsel %vm479, %v510, %v352
      %v515 = vsel %vm484, %v511, %v380
      %v516 = vsel %vm484, %v512, %v383
      %v517 = vsel %vm484, %v513, %v386
      %v518 = vsel %vm484, %v514, %v389
      %v519 = vsel %vm489, %v515, %v417
      %v520 = vsel %vm489, %v516, %v420
      %v521 = vsel %vm489, %v517, %v423
      %v522 = vsel %vm489, %v518, %v426
      %v523 = vsel %vm494, %v519, %v454
      %v524 = vsel %vm494, %v520, %v457
      %v525 = vsel %vm494, %v521, %v460
      %v526 = vsel %vm494, %v522, %v463
      %v527 = vmul.f32 %v523, 0.0625
      %v528 = vmul.f32 %v524, 0.0625
      %v529 = vmul.f32 %v525, 0.0625
      %v530 = vmul.f32 %v526, 0.0625
      %535 = vrot.lane.b32.xlu0 %v527, 8
      %v536 = vpop.permute.xlu0 %535
      %537 = vrot.lane.b32.xlu0 %v528, 8
      %v538 = vpop.permute.xlu0 %537
      %539 = vrot.lane.b32.xlu0 %v529, 8
      %v540 = vpop.permute.xlu0 %539
      %541 = vrot.lane.b32.xlu0 %v530, 8
      %v542 = vpop.permute.xlu0 %541
      %vm547 = vcmask 64512
      %v548 = vsel %vm547, %v495, %v536
      %v549 = vsel %vm547, %v496, %v538
      %v550 = vsel %vm547, %v497, %v540
      %v551 = vsel %vm547, %v498, %v542
      %552 = vst [vmem:[#allocation2] sm:$0xff] 0.0
      %553 = vst [vmem:[#allocation2 + $0x8] sm:$0xff] 0.0
      %554 = vst [vmem:[#allocation2 + $0x10] sm:$0xff] 0.0
      %555 = vst [vmem:[#allocation2 + $0x18] sm:$0xff] 0.0
      %556 = vst [vmem:[#allocation2 + $0x20] sm:$0xff] 0.0
      %557 = vst [vmem:[#allocation2 + $0x28] sm:$0xff] 0.0
      %558 = vst [vmem:[#allocation2 + $0x30] sm:$0xff] 0.0
      %559 = vst [vmem:[#allocation2 + $0x38] sm:$0xff] 0.0
      %560 = vst [vmem:[#allocation2 + $0x40] sm:$0xff] 0.0
      %561 = vst [vmem:[#allocation2 + $0x48] sm:$0xff] 0.0
      %s562 = scalar_lea.vmem [#allocation2], 24
      %vm563 = vcmask 126976
      %564 = vst.msk [vmem:[%s562 + $0x3] sm:$0x1f] %vm563, %v548
      %565 = vst.msk [vmem:[%s562 + $0xb] sm:$0x1f] %vm563, %v549
      %566 = vst.msk [vmem:[%s562 + $0x13] sm:$0x1f] %vm563, %v550
      %567 = vst.msk [vmem:[%s562 + $0x1b] sm:$0x1f] %vm563, %v551
      %572 = vrot.lane.b32.xlu0 %v548, 16
      %v573 = vpop.permute.xlu0 %572
      %574 = vrot.lane.b32.xlu0 %v549, 16
      %v575 = vpop.permute.xlu0 %574
      %576 = vrot.lane.b32.xlu0 %v550, 16
      %v577 = vpop.permute.xlu0 %576
      %578 = vrot.lane.b32.xlu0 %v551, 16
      %v579 = vpop.permute.xlu0 %578
      %vm584 = vcmask 259200
      %585 = vst.msk [vmem:[%s562 + $0x2] sm:$0x3f] %vm584, %v573
      %586 = vst.msk [vmem:[%s562 + $0xa] sm:$0x3f] %vm584, %v575
      %587 = vst.msk [vmem:[%s562 + $0x12] sm:$0x3f] %vm584, %v577
      %588 = vst.msk [vmem:[%s562 + $0x1a] sm:$0x3f] %vm584, %v579
      %589 = vrot.lane.b32.xlu0 %v548, 32
      %v590 = vpop.permute.xlu0 %589
      %591 = vrot.lane.b32.xlu0 %v549, 32
      %v592 = vpop.permute.xlu0 %591
      %593 = vrot.lane.b32.xlu0 %v550, 32
      %v594 = vpop.permute.xlu0 %593
      %595 = vrot.lane.b32.xlu0 %v551, 32
      %v596 = vpop.permute.xlu0 %595
      %vm601 = vcmask 391424
      %602 = vst.msk [vmem:[%s562 + $0x1] sm:$0x7f] %vm601, %v590
      %603 = vst.msk [vmem:[%s562 + $0x9] sm:$0x7f] %vm601, %v592
      %604 = vst.msk [vmem:[%s562 + $0x11] sm:$0x7f] %vm601, %v594
      %605 = vst.msk [vmem:[%s562 + $0x19] sm:$0x7f] %vm601, %v596
      %606 = vrot.lane.b32.xlu0 %v548, 48
      %v607 = vpop.permute.xlu0 %606
      %608 = vrot.lane.b32.xlu0 %v549, 48
      %v609 = vpop.permute.xlu0 %608
      %610 = vrot.lane.b32.xlu0 %v550, 48
      %v611 = vpop.permute.xlu0 %610
      %612 = vrot.lane.b32.xlu0 %v551, 48
      %v613 = vpop.permute.xlu0 %612
      %618 = vst.msk [vmem:[%s562] sm:$0xff] %vm279, %v607
      %619 = vst.msk [vmem:[%s562 + $0x8] sm:$0xff] %vm279, %v609
      %620 = vst.msk [vmem:[%s562 + $0x10] sm:$0xff] %vm279, %v611
      %621 = vst.msk [vmem:[%s562 + $0x18] sm:$0xff] %vm279, %v613
      %622 = vrot.lane.b32.xlu0 %v548, 64
      %v623 = vpop.permute.xlu0 %622
      %624 = vrot.lane.b32.xlu0 %v549, 64
      %v625 = vpop.permute.xlu0 %624
      %626 = vrot.lane.b32.xlu0 %v550, 64
      %v627 = vpop.permute.xlu0 %626
      %628 = vrot.lane.b32.xlu0 %v551, 64
      %v629 = vpop.permute.xlu0 %628
      %vm634 = vcmask 654849
      %635 = vst.msk [vmem:[%s562 - $0x1] sm:$0xfe] %vm634, %v623
      %636 = vst.msk [vmem:[%s562 + $0x7] sm:$0xfe] %vm634, %v625
      %637 = vst.msk [vmem:[%s562 + $0xf] sm:$0xfe] %vm634, %v627
      %638 = vst.msk [vmem:[%s562 + $0x17] sm:$0xfe] %vm634, %v629
      %639 = vrot.lane.b32.xlu0 %v548, 80
      %v640 = vpop.permute.xlu0 %639
      %641 = vrot.lane.b32.xlu0 %v549, 80
      %v642 = vpop.permute.xlu0 %641
      %643 = vrot.lane.b32.xlu0 %v550, 80
      %v644 = vpop.permute.xlu0 %643
      %645 = vrot.lane.b32.xlu0 %v551, 80
      %v646 = vpop.permute.xlu0 %645
      %vm651 = vcmask 786050
      %652 = vst.msk [vmem:[%s562 - $0x2] sm:$0xfc] %vm651, %v640
      %653 = vst.msk [vmem:[%s562 + $0x6] sm:$0xfc] %vm651, %v642
      %654 = vst.msk [vmem:[%s562 + $0xe] sm:$0xfc] %vm651, %v644
      %655 = vst.msk [vmem:[%s562 + $0x16] sm:$0xfc] %vm651, %v646
      %656 = vrot.lane.b32.xlu0 %v548, 96
      %v657 = vpop.permute.xlu0 %656
      %658 = vrot.lane.b32.xlu0 %v549, 96
      %v659 = vpop.permute.xlu0 %658
      %660 = vrot.lane.b32.xlu0 %v550, 96
      %v661 = vpop.permute.xlu0 %660
      %662 = vrot.lane.b32.xlu0 %v551, 96
      %v663 = vpop.permute.xlu0 %662
      %vm668 = vcmask 917251
      %669 = vst.msk [vmem:[%s562 - $0x3] sm:$0xf8] %vm668, %v657
      %670 = vst.msk [vmem:[%s562 + $0x5] sm:$0xf8] %vm668, %v659
      %671 = vst.msk [vmem:[%s562 + $0xd] sm:$0xf8] %vm668, %v661
      %672 = vst.msk [vmem:[%s562 + $0x15] sm:$0xf8] %vm668, %v663
      %v673 = vld [vmem:[#allocation2] sm:$0xff]
      %v674 = vld [vmem:[#allocation2 + $0x8] sm:$0xff]
      %v675 = vld [vmem:[#allocation2 + $0x10] sm:$0xff]
      %v676 = vld [vmem:[#allocation2 + $0x18] sm:$0xff]
      %v677 = vld [vmem:[%s1] sm:$0xff]
      %v678 = vld [vmem:[%s1 + $0x8] sm:$0xff]
      %v679 = vld [vmem:[%s1 + $0x10] sm:$0xff]
      %v680 = vld [vmem:[%s1 + $0x18] sm:$0xff]
      %v681 = vld [vmem:[%s1 + $0x20] sm:$0xff]
      %v682 = vld [vmem:[%s1 + $0x28] sm:$0xff]
      %v683 = vld [vmem:[%s1 + $0x30] sm:$0xff]
      %v684 = vld [vmem:[%s1 + $0x38] sm:$0xff]
      %v685 = vld [vmem:[%s1 + $0x40] sm:$0xff]
      %v686 = vld [vmem:[%s1 + $0x48] sm:$0xff]
      %v687 = vld [vmem:[%s1 + $0x50] sm:$0xff]
      %v688 = vld [vmem:[%s1 + $0x58] sm:$0xff]
      %v689 = vld [vmem:[%s1 + $0x60] sm:$0xff]
      %v690 = vld [vmem:[%s1 + $0x68] sm:$0xff]
      %v691 = vld [vmem:[%s1 + $0x70] sm:$0xff]
      %v692 = vld [vmem:[%s1 + $0x78] sm:$0xff]
      %s693 = scalar_lea.vmem [#allocation2], 8
      %v694 = vld [vmem:[%s693] sm:$0xff]
      %v695 = vld [vmem:[%s693 + $0x8] sm:$0xff]
      %v696 = vld [vmem:[%s693 + $0x10] sm:$0xff]
      %v697 = vld [vmem:[%s693 + $0x18] sm:$0xff]
      %s698 = scalar_lea.vmem %s1, 128
      %v699 = vld [vmem:[%s698] sm:$0xff]
      %v700 = vld [vmem:[%s698 + $0x8] sm:$0xff]
      %v701 = vld [vmem:[%s698 + $0x10] sm:$0xff]
      %v702 = vld [vmem:[%s698 + $0x18] sm:$0xff]
      %v703 = vld [vmem:[%s698 + $0x20] sm:$0xff]
      %v704 = vld [vmem:[%s698 + $0x28] sm:$0xff]
      %v705 = vld [vmem:[%s698 + $0x30] sm:$0xff]
      %v706 = vld [vmem:[%s698 + $0x38] sm:$0xff]
      %v707 = vld [vmem:[%s698 + $0x40] sm:$0xff]
      %v708 = vld [vmem:[%s698 + $0x48] sm:$0xff]
      %v709 = vld [vmem:[%s698 + $0x50] sm:$0xff]
      %v710 = vld [vmem:[%s698 + $0x58] sm:$0xff]
      %v711 = vld [vmem:[%s698 + $0x60] sm:$0xff]
      %v712 = vld [vmem:[%s698 + $0x68] sm:$0xff]
      %v713 = vld [vmem:[%s698 + $0x70] sm:$0xff]
      %v714 = vld [vmem:[%s698 + $0x78] sm:$0xff]
      %715 = vmatprep.subr.mxu0 0.0
      %716 = vmatpush1.msra.mxu0 %v699
      %717 = vmatprep.subr.mxu0 0.0
      %718 = vmatpush1.msra.mxu0 %v700
      %719 = vmatprep.subr.mxu0 0.0
      %720 = vmatpush1.msra.mxu0 %v701
      %721 = vmatprep.subr.mxu0 0.0
      %722 = vmatpush1.msra.mxu0 %v702
      %723 = vmatprep.subr.mxu0 0.0
      %724 = vmatpush1.msra.mxu0 %v703
      %725 = vmatprep.subr.mxu0 0.0
      %726 = vmatpush1.msra.mxu0 %v704
      %727 = vmatprep.subr.mxu0 0.0
      %728 = vmatpush1.msra.mxu0 %v705
      %729 = vmatprep.subr.mxu0 0.0
      %730 = vmatpush1.msra.mxu0 %v706
      %731 = vmatprep.subr.mxu0 0.0
      %732 = vmatpush1.msra.mxu0 %v707
      %733 = vmatprep.subr.mxu0 0.0
      %734 = vmatpush1.msra.mxu0 %v708
      %735 = vmatprep.subr.mxu0 0.0
      %736 = vmatpush1.msra.mxu0 %v709
      %737 = vmatprep.subr.mxu0 0.0
      %738 = vmatpush1.msra.mxu0 %v710
      %739 = vmatprep.subr.mxu0 0.0
      %740 = vmatpush1.msra.mxu0 %v711
      %741 = vmatprep.subr.mxu0 0.0
      %742 = vmatpush1.msra.mxu0 %v712
      %743 = vmatprep.subr.mxu0 0.0
      %744 = vmatpush1.msra.mxu0 %v713
      %745 = vmatprep.subr.mxu0 0.0
      %746 = vmatpush1.msra.mxu0 %v714
      %747 = vmatprep.subr.mxu0 0.0
      %748 = vmatpush1.msra.mxu0 0.0
      %749 = vmatprep.subr.mxu0 0.0
      %750 = vmatpush1.msra.mxu0 0.0
      %751 = vmatprep.subr.mxu0 0.0
      %752 = vmatpush1.msra.mxu0 0.0
      %753 = vmatprep.subr.mxu0 0.0
      %754 = vmatpush1.msra.mxu0 0.0
      %755 = vmatprep.subr.mxu0 0.0
      %756 = vmatpush1.msra.mxu0 0.0
      %757 = vmatprep.subr.mxu0 0.0
      %758 = vmatpush1.msra.mxu0 0.0
      %759 = vmatprep.subr.mxu0 0.0
      %760 = vmatpush1.msra.mxu0 0.0
      %761 = vmatprep.subr.mxu0 0.0
      %762 = vmatpush1.msra.mxu0 0.0
      %763 = vmatprep.subr.mxu0 0.0
      %764 = vmatpush1.msra.mxu0 0.0
      %765 = vmatprep.subr.mxu0 0.0
      %766 = vmatpush1.msra.mxu0 0.0
      %767 = vmatprep.subr.mxu0 0.0
      %768 = vmatpush1.msra.mxu0 0.0
      %769 = vmatprep.subr.mxu0 0.0
      %770 = vmatpush1.msra.mxu0 0.0
      %771 = vmatprep.subr.mxu0 0.0
      %772 = vmatpush1.msra.mxu0 0.0
      %773 = vmatprep.subr.mxu0 0.0
      %774 = vmatpush1.msra.mxu0 0.0
      %775 = vmatprep.subr.mxu0 0.0
      %776 = vmatpush1.msra.mxu0 0.0
      %777 = vmatprep.subr.mxu0 0.0
      %778 = vmatpush1.msra.mxu0 0.0
      %779 = vmatprep.mubr.f32.mxu0 0.0
      %780 = vmatmul.mubr.f32.gmra.mrb[0].mxu0 %v694
      %v781 = vpop.f32.mrb[0].mxu0
      %v782 = vadd.f32 0.0, %v781
      %v783 = vpop.f32.mrb[0].mxu0
      %784 = vmatprep.mubr.f32.mxu0 0.0
      %785 = vmatmul.mubr.f32.gmra.mrb[0].mxu0 %v695
      %v786 = vpop.f32.mrb[0].mxu0
      %v787 = vadd.f32 0.0, %v786
      %v788 = vpop.f32.mrb[0].mxu0
      %789 = vmatprep.mubr.f32.mxu0 0.0
      %790 = vmatmul.mubr.f32.gmra.mrb[0].mxu0 %v696
      %v791 = vpop.f32.mrb[0].mxu0
      %v792 = vadd.f32 0.0, %v791
      %v793 = vpop.f32.mrb[0].mxu0
      %794 = vmatprep.mubr.f32.mxu0 0.0
      %795 = vmatmul.mubr.f32.gmra.mrb[0].mxu0 %v697
      %v796 = vpop.f32.mrb[0].mxu0
      %v797 = vadd.f32 0.0, %v796
      %v798 = vpop.f32.mrb[0].mxu0
      %799 = vdwg.mxu0
      %800 = vmatprep.subr.mxu0 0.0
      %801 = vmatpush1.msra.mxu0 %v677
      %802 = vmatprep.subr.mxu0 0.0
      %803 = vmatpush1.msra.mxu0 %v678
      %804 = vmatprep.subr.mxu0 0.0
      %805 = vmatpush1.msra.mxu0 %v679
      %806 = vmatprep.subr.mxu0 0.0
      %807 = vmatpush1.msra.mxu0 %v680
      %808 = vmatprep.subr.mxu0 0.0
      %809 = vmatpush1.msra.mxu0 %v681
      %810 = vmatprep.subr.mxu0 0.0
      %811 = vmatpush1.msra.mxu0 %v682
      %812 = vmatprep.subr.mxu0 0.0
      %813 = vmatpush1.msra.mxu0 %v683
      %814 = vmatprep.subr.mxu0 0.0
      %815 = vmatpush1.msra.mxu0 %v684
      %816 = vmatprep.subr.mxu0 0.0
      %817 = vmatpush1.msra.mxu0 %v685
      %818 = vmatprep.subr.mxu0 0.0
      %819 = vmatpush1.msra.mxu0 %v686
      %820 = vmatprep.subr.mxu0 0.0
      %821 = vmatpush1.msra.mxu0 %v687
      %822 = vmatprep.subr.mxu0 0.0
      %823 = vmatpush1.msra.mxu0 %v688
      %824 = vmatprep.subr.mxu0 0.0
      %825 = vmatpush1.msra.mxu0 %v689
      %826 = vmatprep.subr.mxu0 0.0
      %827 = vmatpush1.msra.mxu0 %v690
      %828 = vmatprep.subr.mxu0 0.0
      %829 = vmatpush1.msra.mxu0 %v691
      %830 = vmatprep.subr.mxu0 0.0
      %831 = vmatpush1.msra.mxu0 %v692
      %832 = vmatprep.subr.mxu0 0.0
      %833 = vmatpush1.msra.mxu0 0.0
      %834 = vmatprep.subr.mxu0 0.0
      %835 = vmatpush1.msra.mxu0 0.0
      %836 = vmatprep.subr.mxu0 0.0
      %837 = vmatpush1.msra.mxu0 0.0
      %838 = vmatprep.subr.mxu0 0.0
      %839 = vmatpush1.msra.mxu0 0.0
      %840 = vmatprep.subr.mxu0 0.0
      %841 = vmatpush1.msra.mxu0 0.0
      %842 = vmatprep.subr.mxu0 0.0
      %843 = vmatpush1.msra.mxu0 0.0
      %844 = vmatprep.subr.mxu0 0.0
      %845 = vmatpush1.msra.mxu0 0.0
      %846 = vmatprep.subr.mxu0 0.0
      %847 = vmatpush1.msra.mxu0 0.0
      %848 = vmatprep.subr.mxu0 0.0
      %849 = vmatpush1.msra.mxu0 0.0
      %850 = vmatprep.subr.mxu0 0.0
      %851 = vmatpush1.msra.mxu0 0.0
      %852 = vmatprep.subr.mxu0 0.0
      %853 = vmatpush1.msra.mxu0 0.0
      %854 = vmatprep.subr.mxu0 0.0
      %855 = vmatpush1.msra.mxu0 0.0
      %856 = vmatprep.subr.mxu0 0.0
      %857 = vmatpush1.msra.mxu0 0.0
      %858 = vmatprep.subr.mxu0 0.0
      %859 = vmatpush1.msra.mxu0 0.0
      %860 = vmatprep.subr.mxu0 0.0
      %861 = vmatpush1.msra.mxu0 0.0
      %862 = vmatprep.subr.mxu0 0.0
      %863 = vmatpush1.msra.mxu0 0.0
      %864 = vmatprep.mubr.f32.mxu0 0.0
      %865 = vmatmul.mubr.f32.gmra.mrb[0].mxu0 %v673
      %v866 = vpop.f32.mrb[0].mxu0
      %v867 = vadd.f32 %v782, %v866
      %v868 = vpop.f32.mrb[0].mxu0
      %869 = vmatprep.mubr.f32.mxu0 0.0
      %870 = vmatmul.mubr.f32.gmra.mrb[0].mxu0 %v674
      %v871 = vpop.f32.mrb[0].mxu0
      %v872 = vadd.f32 %v787, %v871
      %v873 = vpop.f32.mrb[0].mxu0
      %874 = vmatprep.mubr.f32.mxu0 0.0
      %875 = vmatmul.mubr.f32.gmra.mrb[0].mxu0 %v675
      %v876 = vpop.f32.mrb[0].mxu0
      %v877 = vadd.f32 %v792, %v876
      %v878 = vpop.f32.mrb[0].mxu0
      %879 = vmatprep.mubr.f32.mxu0 0.0
      %880 = vmatmul.mubr.f32.gmra.mrb[0].mxu0 %v676
      %v881 = vpop.f32.mrb[0].mxu0
      %v882 = vadd.f32 %v797, %v881
      %v883 = vpop.f32.mrb[0].mxu0
      %884 = vdwg.mxu0
      %s885 = scalar_lea.vmem [#allocation2], 16
      %v886 = vld [vmem:[%s885] sm:$0xff]
      %v887 = vld [vmem:[%s885 + $0x8] sm:$0xff]
      %v888 = vld [vmem:[%s885 + $0x10] sm:$0xff]
      %v889 = vld [vmem:[%s885 + $0x18] sm:$0xff]
      %s890 = scalar_lea.vmem %s1, 256
      %v891 = vld [vmem:[%s890] sm:$0xff]
      %v892 = vld [vmem:[%s890 + $0x8] sm:$0xff]
      %v893 = vld [vmem:[%s890 + $0x10] sm:$0xff]
      %v894 = vld [vmem:[%s890 + $0x18] sm:$0xff]
      %v895 = vld [vmem:[%s890 + $0x20] sm:$0xff]
      %v896 = vld [vmem:[%s890 + $0x28] sm:$0xff]
      %v897 = vld [vmem:[%s890 + $0x30] sm:$0xff]
      %v898 = vld [vmem:[%s890 + $0x38] sm:$0xff]
      %v899 = vld [vmem:[%s890 + $0x40] sm:$0xff]
      %v900 = vld [vmem:[%s890 + $0x48] sm:$0xff]
      %v901 = vld [vmem:[%s890 + $0x50] sm:$0xff]
      %v902 = vld [vmem:[%s890 + $0x58] sm:$0xff]
      %v903 = vld [vmem:[%s890 + $0x60] sm:$0xff]
      %v904 = vld [vmem:[%s890 + $0x68] sm:$0xff]
      %v905 = vld [vmem:[%s890 + $0x70] sm:$0xff]
      %v906 = vld [vmem:[%s890 + $0x78] sm:$0xff]
      %907 = vmatprep.subr.mxu0 0.0
      %908 = vmatpush1.msra.mxu0 %v891
      %909 = vmatprep.subr.mxu0 0.0
      %910 = vmatpush1.msra.mxu0 %v892
      %911 = vmatprep.subr.mxu0 0.0
      %912 = vmatpush1.msra.mxu0 %v893
      %913 = vmatprep.subr.mxu0 0.0
      %914 = vmatpush1.msra.mxu0 %v894
      %915 = vmatprep.subr.mxu0 0.0
      %916 = vmatpush1.msra.mxu0 %v895
      %917 = vmatprep.subr.mxu0 0.0
      %918 = vmatpush1.msra.mxu0 %v896
      %919 = vmatprep.subr.mxu0 0.0
      %920 = vmatpush1.msra.mxu0 %v897
      %921 = vmatprep.subr.mxu0 0.0
      %922 = vmatpush1.msra.mxu0 %v898
      %923 = vmatprep.subr.mxu0 0.0
      %924 = vmatpush1.msra.mxu0 %v899
      %925 = vmatprep.subr.mxu0 0.0
      %926 = vmatpush1.msra.mxu0 %v900
      %927 = vmatprep.subr.mxu0 0.0
      %928 = vmatpush1.msra.mxu0 %v901
      %929 = vmatprep.subr.mxu0 0.0
      %930 = vmatpush1.msra.mxu0 %v902
      %931 = vmatprep.subr.mxu0 0.0
      %932 = vmatpush1.msra.mxu0 %v903
      %933 = vmatprep.subr.mxu0 0.0
      %934 = vmatpush1.msra.mxu0 %v904
      %935 = vmatprep.subr.mxu0 0.0
      %936 = vmatpush1.msra.mxu0 %v905
      %937 = vmatprep.subr.mxu0 0.0
      %938 = vmatpush1.msra.mxu0 %v906
      %939 = vmatprep.subr.mxu0 0.0
      %940 = vmatpush1.msra.mxu0 0.0
      %941 = vmatprep.subr.mxu0 0.0
      %942 = vmatpush1.msra.mxu0 0.0
      %943 = vmatprep.subr.mxu0 0.0
      %944 = vmatpush1.msra.mxu0 0.0
      %945 = vmatprep.subr.mxu0 0.0
      %946 = vmatpush1.msra.mxu0 0.0
      %947 = vmatprep.subr.mxu0 0.0
      %948 = vmatpush1.msra.mxu0 0.0
      %949 = vmatprep.subr.mxu0 0.0
      %950 = vmatpush1.msra.mxu0 0.0
      %951 = vmatprep.subr.mxu0 0.0
      %952 = vmatpush1.msra.mxu0 0.0
      %953 = vmatprep.subr.mxu0 0.0
      %954 = vmatpush1.msra.mxu0 0.0
      %955 = vmatprep.subr.mxu0 0.0
      %956 = vmatpush1.msra.mxu0 0.0
      %957 = vmatprep.subr.mxu0 0.0
      %958 = vmatpush1.msra.mxu0 0.0
      %959 = vmatprep.subr.mxu0 0.0
      %960 = vmatpush1.msra.mxu0 0.0
      %961 = vmatprep.subr.mxu0 0.0
      %962 = vmatpush1.msra.mxu0 0.0
      %963 = vmatprep.subr.mxu0 0.0
      %964 = vmatpush1.msra.mxu0 0.0
      %965 = vmatprep.subr.mxu0 0.0
      %966 = vmatpush1.msra.mxu0 0.0
      %967 = vmatprep.subr.mxu0 0.0
      %968 = vmatpush1.msra.mxu0 0.0
      %969 = vmatprep.subr.mxu0 0.0
      %970 = vmatpush1.msra.mxu0 0.0
      %971 = vmatprep.mubr.f32.mxu0 0.0
      %972 = vmatmul.mubr.f32.gmra.mrb[0].mxu0 %v886
      %v973 = vpop.f32.mrb[0].mxu0
      %v974 = vadd.f32 0.0, %v973
      %v975 = vpop.f32.mrb[0].mxu0
      %976 = vmatprep.mubr.f32.mxu0 0.0
      %977 = vmatmul.mubr.f32.gmra.mrb[0].mxu0 %v887
      %v978 = vpop.f32.mrb[0].mxu0
      %v979 = vadd.f32 0.0, %v978
      %v980 = vpop.f32.mrb[0].mxu0
      %981 = vmatprep.mubr.f32.mxu0 0.0
      %982 = vmatmul.mubr.f32.gmra.mrb[0].mxu0 %v888
      %v983 = vpop.f32.mrb[0].mxu0
      %v984 = vadd.f32 0.0, %v983
      %v985 = vpop.f32.mrb[0].mxu0
      %986 = vmatprep.mubr.f32.mxu0 0.0
      %987 = vmatmul.mubr.f32.gmra.mrb[0].mxu0 %v889
      %v988 = vpop.f32.mrb[0].mxu0
      %v989 = vadd.f32 0.0, %v988
      %v990 = vpop.f32.mrb[0].mxu0
      %991 = vdwg.mxu0
      %v992 = vadd.f32 %v867, %v974
      %v993 = vadd.f32 %v872, %v979
      %v994 = vadd.f32 %v877, %v984
      %v995 = vadd.f32 %v882, %v989
      %v996 = vld [vmem:[%s562] sm:$0xff]
      %v997 = vld [vmem:[%s562 + $0x8] sm:$0xff]
      %v998 = vld [vmem:[%s562 + $0x10] sm:$0xff]
      %v999 = vld [vmem:[%s562 + $0x18] sm:$0xff]
      %s1000 = scalar_lea.vmem %s1, 384
      %v1001 = vld [vmem:[%s1000] sm:$0xff]
      %v1002 = vld [vmem:[%s1000 + $0x8] sm:$0xff]
      %v1003 = vld [vmem:[%s1000 + $0x10] sm:$0xff]
      %v1004 = vld [vmem:[%s1000 + $0x18] sm:$0xff]
      %v1005 = vld [vmem:[%s1000 + $0x20] sm:$0xff]
      %v1006 = vld [vmem:[%s1000 + $0x28] sm:$0xff]
      %v1007 = vld [vmem:[%s1000 + $0x30] sm:$0xff]
      %v1008 = vld [vmem:[%s1000 + $0x38] sm:$0xff]
      %v1009 = vld [vmem:[%s1000 + $0x40] sm:$0xff]
      %v1010 = vld [vmem:[%s1000 + $0x48] sm:$0xff]
      %v1011 = vld [vmem:[%s1000 + $0x50] sm:$0xff]
      %v1012 = vld [vmem:[%s1000 + $0x58] sm:$0xff]
      %v1013 = vld [vmem:[%s1000 + $0x60] sm:$0xff]
      %v1014 = vld [vmem:[%s1000 + $0x68] sm:$0xff]
      %v1015 = vld [vmem:[%s1000 + $0x70] sm:$0xff]
      %v1016 = vld [vmem:[%s1000 + $0x78] sm:$0xff]
      %1017 = vmatprep.subr.mxu0 0.0
      %1018 = vmatpush1.msra.mxu0 %v1001
      %1019 = vmatprep.subr.mxu0 0.0
      %1020 = vmatpush1.msra.mxu0 %v1002
      %1021 = vmatprep.subr.mxu0 0.0
      %1022 = vmatpush1.msra.mxu0 %v1003
      %1023 = vmatprep.subr.mxu0 0.0
      %1024 = vmatpush1.msra.mxu0 %v1004
      %1025 = vmatprep.subr.mxu0 0.0
      %1026 = vmatpush1.msra.mxu0 %v1005
      %1027 = vmatprep.subr.mxu0 0.0
      %1028 = vmatpush1.msra.mxu0 %v1006
      %1029 = vmatprep.subr.mxu0 0.0
      %1030 = vmatpush1.msra.mxu0 %v1007
      %1031 = vmatprep.subr.mxu0 0.0
      %1032 = vmatpush1.msra.mxu0 %v1008
      %1033 = vmatprep.subr.mxu0 0.0
      %1034 = vmatpush1.msra.mxu0 %v1009
      %1035 = vmatprep.subr.mxu0 0.0
      %1036 = vmatpush1.msra.mxu0 %v1010
      %1037 = vmatprep.subr.mxu0 0.0
      %1038 = vmatpush1.msra.mxu0 %v1011
      %1039 = vmatprep.subr.mxu0 0.0
      %1040 = vmatpush1.msra.mxu0 %v1012
      %1041 = vmatprep.subr.mxu0 0.0
      %1042 = vmatpush1.msra.mxu0 %v1013
      %1043 = vmatprep.subr.mxu0 0.0
      %1044 = vmatpush1.msra.mxu0 %v1014
      %1045 = vmatprep.subr.mxu0 0.0
      %1046 = vmatpush1.msra.mxu0 %v1015
      %1047 = vmatprep.subr.mxu0 0.0
      %1048 = vmatpush1.msra.mxu0 %v1016
      %1049 = vmatprep.subr.mxu0 0.0
      %1050 = vmatpush1.msra.mxu0 0.0
      %1051 = vmatprep.subr.mxu0 0.0
      %1052 = vmatpush1.msra.mxu0 0.0
      %1053 = vmatprep.subr.mxu0 0.0
      %1054 = vmatpush1.msra.mxu0 0.0
      %1055 = vmatprep.subr.mxu0 0.0
      %1056 = vmatpush1.msra.mxu0 0.0
      %1057 = vmatprep.subr.mxu0 0.0
      %1058 = vmatpush1.msra.mxu0 0.0
      %1059 = vmatprep.subr.mxu0 0.0
      %1060 = vmatpush1.msra.mxu0 0.0
      %1061 = vmatprep.subr.mxu0 0.0
      %1062 = vmatpush1.msra.mxu0 0.0
      %1063 = vmatprep.subr.mxu0 0.0
      %1064 = vmatpush1.msra.mxu0 0.0
      %1065 = vmatprep.subr.mxu0 0.0
      %1066 = vmatpush1.msra.mxu0 0.0
      %1067 = vmatprep.subr.mxu0 0.0
      %1068 = vmatpush1.msra.mxu0 0.0
      %1069 = vmatprep.subr.mxu0 0.0
      %1070 = vmatpush1.msra.mxu0 0.0
      %1071 = vmatprep.subr.mxu0 0.0
      %1072 = vmatpush1.msra.mxu0 0.0
      %1073 = vmatprep.subr.mxu0 0.0
      %1074 = vmatpush1.msra.mxu0 0.0
      %1075 = vmatprep.subr.mxu0 0.0
      %1076 = vmatpush1.msra.mxu0 0.0
      %1077 = vmatprep.subr.mxu0 0.0
      %1078 = vmatpush1.msra.mxu0 0.0
      %1079 = vmatprep.subr.mxu0 0.0
      %1080 = vmatpush1.msra.mxu0 0.0
      %1081 = vmatprep.mubr.f32.mxu0 0.0
      %1082 = vmatmul.mubr.f32.gmra.mrb[0].mxu0 %v996
      %v1083 = vpop.f32.mrb[0].mxu0
      %v1084 = vadd.f32 0.0, %v1083
      %v1085 = vpop.f32.mrb[0].mxu0
      %1086 = vmatprep.mubr.f32.mxu0 0.0
      %1087 = vmatmul.mubr.f32.gmra.mrb[0].mxu0 %v997
      %v1088 = vpop.f32.mrb[0].mxu0
      %v1089 = vadd.f32 0.0, %v1088
      %v1090 = vpop.f32.mrb[0].mxu0
      %1091 = vmatprep.mubr.f32.mxu0 0.0
      %1092 = vmatmul.mubr.f32.gmra.mrb[0].mxu0 %v998
      %v1093 = vpop.f32.mrb[0].mxu0
      %v1094 = vadd.f32 0.0, %v1093
      %v1095 = vpop.f32.mrb[0].mxu0
      %1096 = vmatprep.mubr.f32.mxu0 0.0
      %1097 = vmatmul.mubr.f32.gmra.mrb[0].mxu0 %v999
      %v1098 = vpop.f32.mrb[0].mxu0
      %v1099 = vadd.f32 0.0, %v1098
      %v1100 = vpop.f32.mrb[0].mxu0
      %1101 = vdwg.mxu0
      %v1102 = vadd.f32 %v992, %v1084
      %v1103 = vadd.f32 %v993, %v1089
      %v1104 = vadd.f32 %v994, %v1094
      %v1105 = vadd.f32 %v995, %v1099
      %s1106 = scalar_lea.vmem [#allocation2], 32
      %v1107 = vld [vmem:[%s1106] sm:$0xff]
      %v1108 = vld [vmem:[%s1106 + $0x8] sm:$0xff]
      %v1109 = vld [vmem:[%s1106 + $0x10] sm:$0xff]
      %v1110 = vld [vmem:[%s1106 + $0x18] sm:$0xff]
      %s1111 = scalar_lea.vmem %s1, 512
      %v1112 = vld [vmem:[%s1111] sm:$0xff]
      %v1113 = vld [vmem:[%s1111 + $0x8] sm:$0xff]
      %v1114 = vld [vmem:[%s1111 + $0x10] sm:$0xff]
      %v1115 = vld [vmem:[%s1111 + $0x18] sm:$0xff]
      %v1116 = vld [vmem:[%s1111 + $0x20] sm:$0xff]
      %v1117 = vld [vmem:[%s1111 + $0x28] sm:$0xff]
      %v1118 = vld [vmem:[%s1111 + $0x30] sm:$0xff]
      %v1119 = vld [vmem:[%s1111 + $0x38] sm:$0xff]
      %v1120 = vld [vmem:[%s1111 + $0x40] sm:$0xff]
      %v1121 = vld [vmem:[%s1111 + $0x48] sm:$0xff]
      %v1122 = vld [vmem:[%s1111 + $0x50] sm:$0xff]
      %v1123 = vld [vmem:[%s1111 + $0x58] sm:$0xff]
      %v1124 = vld [vmem:[%s1111 + $0x60] sm:$0xff]
      %v1125 = vld [vmem:[%s1111 + $0x68] sm:$0xff]
      %v1126 = vld [vmem:[%s1111 + $0x70] sm:$0xff]
      %v1127 = vld [vmem:[%s1111 + $0x78] sm:$0xff]
      %1128 = vmatprep.subr.mxu0 0.0
      %1129 = vmatpush1.msra.mxu0 %v1112
      %1130 = vmatprep.subr.mxu0 0.0
      %1131 = vmatpush1.msra.mxu0 %v1113
      %1132 = vmatprep.subr.mxu0 0.0
      %1133 = vmatpush1.msra.mxu0 %v1114
      %1134 = vmatprep.subr.mxu0 0.0
      %1135 = vmatpush1.msra.mxu0 %v1115
      %1136 = vmatprep.subr.mxu0 0.0
      %1137 = vmatpush1.msra.mxu0 %v1116
      %1138 = vmatprep.subr.mxu0 0.0
      %1139 = vmatpush1.msra.mxu0 %v1117
      %1140 = vmatprep.subr.mxu0 0.0
      %1141 = vmatpush1.msra.mxu0 %v1118
      %1142 = vmatprep.subr.mxu0 0.0
      %1143 = vmatpush1.msra.mxu0 %v1119
      %1144 = vmatprep.subr.mxu0 0.0
      %1145 = vmatpush1.msra.mxu0 %v1120
      %1146 = vmatprep.subr.mxu0 0.0
      %1147 = vmatpush1.msra.mxu0 %v1121
      %1148 = vmatprep.subr.mxu0 0.0
      %1149 = vmatpush1.msra.mxu0 %v1122
      %1150 = vmatprep.subr.mxu0 0.0
      %1151 = vmatpush1.msra.mxu0 %v1123
      %1152 = vmatprep.subr.mxu0 0.0
      %1153 = vmatpush1.msra.mxu0 %v1124
      %1154 = vmatprep.subr.mxu0 0.0
      %1155 = vmatpush1.msra.mxu0 %v1125
      %1156 = vmatprep.subr.mxu0 0.0
      %1157 = vmatpush1.msra.mxu0 %v1126
      %1158 = vmatprep.subr.mxu0 0.0
      %1159 = vmatpush1.msra.mxu0 %v1127
      %1160 = vmatprep.subr.mxu0 0.0
      %1161 = vmatpush1.msra.mxu0 0.0
      %1162 = vmatprep.subr.mxu0 0.0
      %1163 = vmatpush1.msra.mxu0 0.0
      %1164 = vmatprep.subr.mxu0 0.0
      %1165 = vmatpush1.msra.mxu0 0.0
      %1166 = vmatprep.subr.mxu0 0.0
      %1167 = vmatpush1.msra.mxu0 0.0
      %1168 = vmatprep.subr.mxu0 0.0
      %1169 = vmatpush1.msra.mxu0 0.0
      %1170 = vmatprep.subr.mxu0 0.0
      %1171 = vmatpush1.msra.mxu0 0.0
      %1172 = vmatprep.subr.mxu0 0.0
      %1173 = vmatpush1.msra.mxu0 0.0
      %1174 = vmatprep.subr.mxu0 0.0
      %1175 = vmatpush1.msra.mxu0 0.0
      %1176 = vmatprep.subr.mxu0 0.0
      %1177 = vmatpush1.msra.mxu0 0.0
      %1178 = vmatprep.subr.mxu0 0.0
      %1179 = vmatpush1.msra.mxu0 0.0
      %1180 = vmatprep.subr.mxu0 0.0
      %1181 = vmatpush1.msra.mxu0 0.0
      %1182 = vmatprep.subr.mxu0 0.0
      %1183 = vmatpush1.msra.mxu0 0.0
      %1184 = vmatprep.subr.mxu0 0.0
      %1185 = vmatpush1.msra.mxu0 0.0
      %1186 = vmatprep.subr.mxu0 0.0
      %1187 = vmatpush1.msra.mxu0 0.0
      %1188 = vmatprep.subr.mxu0 0.0
      %1189 = vmatpush1.msra.mxu0 0.0
      %1190 = vmatprep.subr.mxu0 0.0
      %1191 = vmatpush1.msra.mxu0 0.0
      %1192 = vmatprep.mubr.f32.mxu0 0.0
      %1193 = vmatmul.mubr.f32.gmra.mrb[0].mxu0 %v1107
      %v1194 = vpop.f32.mrb[0].mxu0
      %v1195 = vadd.f32 0.0, %v1194
      %v1196 = vpop.f32.mrb[0].mxu0
      %1197 = vmatprep.mubr.f32.mxu0 0.0
      %1198 = vmatmul.mubr.f32.gmra.mrb[0].mxu0 %v1108
      %v1199 = vpop.f32.mrb[0].mxu0
      %v1200 = vadd.f32 0.0, %v1199
      %v1201 = vpop.f32.mrb[0].mxu0
      %1202 = vmatprep.mubr.f32.mxu0 0.0
      %1203 = vmatmul.mubr.f32.gmra.mrb[0].mxu0 %v1109
      %v1204 = vpop.f32.mrb[0].mxu0
      %v1205 = vadd.f32 0.0, %v1204
      %v1206 = vpop.f32.mrb[0].mxu0
      %1207 = vmatprep.mubr.f32.mxu0 0.0
      %1208 = vmatmul.mubr.f32.gmra.mrb[0].mxu0 %v1110
      %v1209 = vpop.f32.mrb[0].mxu0
      %v1210 = vadd.f32 0.0, %v1209
      %v1211 = vpop.f32.mrb[0].mxu0
      %1212 = vdwg.mxu0
      %v1213 = vadd.f32 %v1102, %v1195
      %v1214 = vadd.f32 %v1103, %v1200
      %v1215 = vadd.f32 %v1104, %v1205
      %v1216 = vadd.f32 %v1105, %v1210
      %s1217 = scalar_lea.vmem [#allocation2], 40
      %v1218 = vld [vmem:[%s1217] sm:$0xff]
      %v1219 = vld [vmem:[%s1217 + $0x8] sm:$0xff]
      %v1220 = vld [vmem:[%s1217 + $0x10] sm:$0xff]
      %v1221 = vld [vmem:[%s1217 + $0x18] sm:$0xff]
      %s1222 = scalar_lea.vmem %s1, 640
      %v1223 = vld [vmem:[%s1222] sm:$0xff]
      %v1224 = vld [vmem:[%s1222 + $0x8] sm:$0xff]
      %v1225 = vld [vmem:[%s1222 + $0x10] sm:$0xff]
      %v1226 = vld [vmem:[%s1222 + $0x18] sm:$0xff]
      %v1227 = vld [vmem:[%s1222 + $0x20] sm:$0xff]
      %v1228 = vld [vmem:[%s1222 + $0x28] sm:$0xff]
      %v1229 = vld [vmem:[%s1222 + $0x30] sm:$0xff]
      %v1230 = vld [vmem:[%s1222 + $0x38] sm:$0xff]
      %v1231 = vld [vmem:[%s1222 + $0x40] sm:$0xff]
      %v1232 = vld [vmem:[%s1222 + $0x48] sm:$0xff]
      %v1233 = vld [vmem:[%s1222 + $0x50] sm:$0xff]
      %v1234 = vld [vmem:[%s1222 + $0x58] sm:$0xff]
      %v1235 = vld [vmem:[%s1222 + $0x60] sm:$0xff]
      %v1236 = vld [vmem:[%s1222 + $0x68] sm:$0xff]
      %v1237 = vld [vmem:[%s1222 + $0x70] sm:$0xff]
      %v1238 = vld [vmem:[%s1222 + $0x78] sm:$0xff]
      %1239 = vmatprep.subr.mxu0 0.0
      %1240 = vmatpush1.msra.mxu0 %v1223
      %1241 = vmatprep.subr.mxu0 0.0
      %1242 = vmatpush1.msra.mxu0 %v1224
      %1243 = vmatprep.subr.mxu0 0.0
      %1244 = vmatpush1.msra.mxu0 %v1225
      %1245 = vmatprep.subr.mxu0 0.0
      %1246 = vmatpush1.msra.mxu0 %v1226
      %1247 = vmatprep.subr.mxu0 0.0
      %1248 = vmatpush1.msra.mxu0 %v1227
      %1249 = vmatprep.subr.mxu0 0.0
      %1250 = vmatpush1.msra.mxu0 %v1228
      %1251 = vmatprep.subr.mxu0 0.0
      %1252 = vmatpush1.msra.mxu0 %v1229
      %1253 = vmatprep.subr.mxu0 0.0
      %1254 = vmatpush1.msra.mxu0 %v1230
      %1255 = vmatprep.subr.mxu0 0.0
      %1256 = vmatpush1.msra.mxu0 %v1231
      %1257 = vmatprep.subr.mxu0 0.0
      %1258 = vmatpush1.msra.mxu0 %v1232
      %1259 = vmatprep.subr.mxu0 0.0
      %1260 = vmatpush1.msra.mxu0 %v1233
      %1261 = vmatprep.subr.mxu0 0.0
      %1262 = vmatpush1.msra.mxu0 %v1234
      %1263 = vmatprep.subr.mxu0 0.0
      %1264 = vmatpush1.msra.mxu0 %v1235
      %1265 = vmatprep.subr.mxu0 0.0
      %1266 = vmatpush1.msra.mxu0 %v1236
      %1267 = vmatprep.subr.mxu0 0.0
      %1268 = vmatpush1.msra.mxu0 %v1237
      %1269 = vmatprep.subr.mxu0 0.0
      %1270 = vmatpush1.msra.mxu0 %v1238
      %1271 = vmatprep.subr.mxu0 0.0
      %1272 = vmatpush1.msra.mxu0 0.0
      %1273 = vmatprep.subr.mxu0 0.0
      %1274 = vmatpush1.msra.mxu0 0.0
      %1275 = vmatprep.subr.mxu0 0.0
      %1276 = vmatpush1.msra.mxu0 0.0
      %1277 = vmatprep.subr.mxu0 0.0
      %1278 = vmatpush1.msra.mxu0 0.0
      %1279 = vmatprep.subr.mxu0 0.0
      %1280 = vmatpush1.msra.mxu0 0.0
      %1281 = vmatprep.subr.mxu0 0.0
      %1282 = vmatpush1.msra.mxu0 0.0
      %1283 = vmatprep.subr.mxu0 0.0
      %1284 = vmatpush1.msra.mxu0 0.0
      %1285 = vmatprep.subr.mxu0 0.0
      %1286 = vmatpush1.msra.mxu0 0.0
      %1287 = vmatprep.subr.mxu0 0.0
      %1288 = vmatpush1.msra.mxu0 0.0
      %1289 = vmatprep.subr.mxu0 0.0
      %1290 = vmatpush1.msra.mxu0 0.0
      %1291 = vmatprep.subr.mxu0 0.0
      %1292 = vmatpush1.msra.mxu0 0.0
      %1293 = vmatprep.subr.mxu0 0.0
      %1294 = vmatpush1.msra.mxu0 0.0
      %1295 = vmatprep.subr.mxu0 0.0
      %1296 = vmatpush1.msra.mxu0 0.0
      %1297 = vmatprep.subr.mxu0 0.0
      %1298 = vmatpush1.msra.mxu0 0.0
      %1299 = vmatprep.subr.mxu0 0.0
      %1300 = vmatpush1.msra.mxu0 0.0
      %1301 = vmatprep.subr.mxu0 0.0
      %1302 = vmatpush1.msra.mxu0 0.0
      %1303 = vmatprep.mubr.f32.mxu0 0.0
      %1304 = vmatmul.mubr.f32.gmra.mrb[0].mxu0 %v1218
      %v1305 = vpop.f32.mrb[0].mxu0
      %v1306 = vadd.f32 0.0, %v1305
      %v1307 = vpop.f32.mrb[0].mxu0
      %1308 = vmatprep.mubr.f32.mxu0 0.0
      %1309 = vmatmul.mubr.f32.gmra.mrb[0].mxu0 %v1219
      %v1310 = vpop.f32.mrb[0].mxu0
      %v1311 = vadd.f32 0.0, %v1310
      %v1312 = vpop.f32.mrb[0].mxu0
      %1313 = vmatprep.mubr.f32.mxu0 0.0
      %1314 = vmatmul.mubr.f32.gmra.mrb[0].mxu0 %v1220
      %v1315 = vpop.f32.mrb[0].mxu0
      %v1316 = vadd.f32 0.0, %v1315
      %v1317 = vpop.f32.mrb[0].mxu0
      %1318 = vmatprep.mubr.f32.mxu0 0.0
      %1319 = vmatmul.mubr.f32.gmra.mrb[0].mxu0 %v1221
      %v1320 = vpop.f32.mrb[0].mxu0
      %v1321 = vadd.f32 0.0, %v1320
      %v1322 = vpop.f32.mrb[0].mxu0
      %1323 = vdwg.mxu0
      %v1324 = vadd.f32 %v1213, %v1306
      %v1325 = vadd.f32 %v1214, %v1311
      %v1326 = vadd.f32 %v1215, %v1316
      %v1327 = vadd.f32 %v1216, %v1321
      %s1328 = scalar_lea.vmem [#allocation2], 48
      %v1329 = vld [vmem:[%s1328] sm:$0xff]
      %v1330 = vld [vmem:[%s1328 + $0x8] sm:$0xff]
      %v1331 = vld [vmem:[%s1328 + $0x10] sm:$0xff]
      %v1332 = vld [vmem:[%s1328 + $0x18] sm:$0xff]
      %s1333 = scalar_lea.vmem %s1, 768
      %v1334 = vld [vmem:[%s1333] sm:$0xff]
      %v1335 = vld [vmem:[%s1333 + $0x8] sm:$0xff]
      %v1336 = vld [vmem:[%s1333 + $0x10] sm:$0xff]
      %v1337 = vld [vmem:[%s1333 + $0x18] sm:$0xff]
      %v1338 = vld [vmem:[%s1333 + $0x20] sm:$0xff]
      %v1339 = vld [vmem:[%s1333 + $0x28] sm:$0xff]
      %v1340 = vld [vmem:[%s1333 + $0x30] sm:$0xff]
      %v1341 = vld [vmem:[%s1333 + $0x38] sm:$0xff]
      %v1342 = vld [vmem:[%s1333 + $0x40] sm:$0xff]
      %v1343 = vld [vmem:[%s1333 + $0x48] sm:$0xff]
      %v1344 = vld [vmem:[%s1333 + $0x50] sm:$0xff]
      %v1345 = vld [vmem:[%s1333 + $0x58] sm:$0xff]
      %v1346 = vld [vmem:[%s1333 + $0x60] sm:$0xff]
      %v1347 = vld [vmem:[%s1333 + $0x68] sm:$0xff]
      %v1348 = vld [vmem:[%s1333 + $0x70] sm:$0xff]
      %v1349 = vld [vmem:[%s1333 + $0x78] sm:$0xff]
      %1350 = vmatprep.subr.mxu0 0.0
      %1351 = vmatpush1.msra.mxu0 %v1334
      %1352 = vmatprep.subr.mxu0 0.0
      %1353 = vmatpush1.msra.mxu0 %v1335
      %1354 = vmatprep.subr.mxu0 0.0
      %1355 = vmatpush1.msra.mxu0 %v1336
      %1356 = vmatprep.subr.mxu0 0.0
      %1357 = vmatpush1.msra.mxu0 %v1337
      %1358 = vmatprep.subr.mxu0 0.0
      %1359 = vmatpush1.msra.mxu0 %v1338
      %1360 = vmatprep.subr.mxu0 0.0
      %1361 = vmatpush1.msra.mxu0 %v1339
      %1362 = vmatprep.subr.mxu0 0.0
      %1363 = vmatpush1.msra.mxu0 %v1340
      %1364 = vmatprep.subr.mxu0 0.0
      %1365 = vmatpush1.msra.mxu0 %v1341
      %1366 = vmatprep.subr.mxu0 0.0
      %1367 = vmatpush1.msra.mxu0 %v1342
      %1368 = vmatprep.subr.mxu0 0.0
      %1369 = vmatpush1.msra.mxu0 %v1343
      %1370 = vmatprep.subr.mxu0 0.0
      %1371 = vmatpush1.msra.mxu0 %v1344
      %1372 = vmatprep.subr.mxu0 0.0
      %1373 = vmatpush1.msra.mxu0 %v1345
      %1374 = vmatprep.subr.mxu0 0.0
      %1375 = vmatpush1.msra.mxu0 %v1346
      %1376 = vmatprep.subr.mxu0 0.0
      %1377 = vmatpush1.msra.mxu0 %v1347
      %1378 = vmatprep.subr.mxu0 0.0
      %1379 = vmatpush1.msra.mxu0 %v1348
      %1380 = vmatprep.subr.mxu0 0.0
      %1381 = vmatpush1.msra.mxu0 %v1349
      %1382 = vmatprep.subr.mxu0 0.0
      %1383 = vmatpush1.msra.mxu0 0.0
      %1384 = vmatprep.subr.mxu0 0.0
      %1385 = vmatpush1.msra.mxu0 0.0
      %1386 = vmatprep.subr.mxu0 0.0
      %1387 = vmatpush1.msra.mxu0 0.0
      %1388 = vmatprep.subr.mxu0 0.0
      %1389 = vmatpush1.msra.mxu0 0.0
      %1390 = vmatprep.subr.mxu0 0.0
      %1391 = vmatpush1.msra.mxu0 0.0
      %1392 = vmatprep.subr.mxu0 0.0
      %1393 = vmatpush1.msra.mxu0 0.0
      %1394 = vmatprep.subr.mxu0 0.0
      %1395 = vmatpush1.msra.mxu0 0.0
      %1396 = vmatprep.subr.mxu0 0.0
      %1397 = vmatpush1.msra.mxu0 0.0
      %1398 = vmatprep.subr.mxu0 0.0
      %1399 = vmatpush1.msra.mxu0 0.0
      %1400 = vmatprep.subr.mxu0 0.0
      %1401 = vmatpush1.msra.mxu0 0.0
      %1402 = vmatprep.subr.mxu0 0.0
      %1403 = vmatpush1.msra.mxu0 0.0
      %1404 = vmatprep.subr.mxu0 0.0
      %1405 = vmatpush1.msra.mxu0 0.0
      %1406 = vmatprep.subr.mxu0 0.0
      %1407 = vmatpush1.msra.mxu0 0.0
      %1408 = vmatprep.subr.mxu0 0.0
      %1409 = vmatpush1.msra.mxu0 0.0
      %1410 = vmatprep.subr.mxu0 0.0
      %1411 = vmatpush1.msra.mxu0 0.0
      %1412 = vmatprep.subr.mxu0 0.0
      %1413 = vmatpush1.msra.mxu0 0.0
      %1414 = vmatprep.mubr.f32.mxu0 0.0
      %1415 = vmatmul.mubr.f32.gmra.mrb[0].mxu0 %v1329
      %v1416 = vpop.f32.mrb[0].mxu0
      %v1417 = vadd.f32 0.0, %v1416
      %v1418 = vpop.f32.mrb[0].mxu0
      %1419 = vmatprep.mubr.f32.mxu0 0.0
      %1420 = vmatmul.mubr.f32.gmra.mrb[0].mxu0 %v1330
      %v1421 = vpop.f32.mrb[0].mxu0
      %v1422 = vadd.f32 0.0, %v1421
      %v1423 = vpop.f32.mrb[0].mxu0
      %1424 = vmatprep.mubr.f32.mxu0 0.0
      %1425 = vmatmul.mubr.f32.gmra.mrb[0].mxu0 %v1331
      %v1426 = vpop.f32.mrb[0].mxu0
      %v1427 = vadd.f32 0.0, %v1426
      %v1428 = vpop.f32.mrb[0].mxu0
      %1429 = vmatprep.mubr.f32.mxu0 0.0
      %1430 = vmatmul.mubr.f32.gmra.mrb[0].mxu0 %v1332
      %v1431 = vpop.f32.mrb[0].mxu0
      %v1432 = vadd.f32 0.0, %v1431
      %v1433 = vpop.f32.mrb[0].mxu0
      %1434 = vdwg.mxu0
      %v1435 = vadd.f32 %v1324, %v1417
      %v1436 = vadd.f32 %v1325, %v1422
      %v1437 = vadd.f32 %v1326, %v1427
      %v1438 = vadd.f32 %v1327, %v1432
      %s1439 = sld [smem:[#allocation3]]
      %v1440 = vstv %s1439
      %v1441 = vadd.f32 %v1435, %v1440
      %v1442 = vadd.f32 %v1436, %v1440
      %v1443 = vadd.f32 %v1437, %v1440
      %v1444 = vadd.f32 %v1438, %v1440
      %v1445 = vsub.f32 0.0, %v1441
      %v1446 = vsub.f32 0.0, %v1442
      %v1447 = vsub.f32 0.0, %v1443
      %v1448 = vsub.f32 0.0, %v1444
      %v1449 = vmul.f32 %v1445, 1.442695
      %v1450 = vpow.pop %v1449
      %v1451 = vmul.f32 %v1446, 1.442695
      %v1452 = vpow.pop %v1451
      %v1453 = vmul.f32 %v1447, 1.442695
      %v1454 = vpow.pop %v1453
      %v1455 = vmul.f32 %v1448, 1.442695
      %v1456 = vpow.pop %v1455
      %v1457 = vadd.f32 %v1450, 1.0
      %v1458 = vadd.f32 %v1452, 1.0
      %v1459 = vadd.f32 %v1454, 1.0
      %v1460 = vadd.f32 %v1456, 1.0
      %v1461 = vrcp.pop %v1457
      %v1462 = vmul.f32 1.0, %v1461
      %v1463 = vrcp.pop %v1458
      %v1464 = vmul.f32 1.0, %v1463
      %v1465 = vrcp.pop %v1459
      %v1466 = vmul.f32 1.0, %v1465
      %v1467 = vrcp.pop %v1460
      %v1468 = vmul.f32 1.0, %v1467
      %v1469 = vlaneseq
      %v1470 = vand.u32 %v1469, 127
      %v1471 = vlaneseq
      %v1472 = vshrl.u32 %v1471, 7
      %v1473 = vmul.u32 %v1472, 16
      %vm1474 = vcmp.ge.s32.totalorder %v1470, %v1473
      %v1475 = vadd.s32 %v1473, 16
      %vm1476 = vcmp.lt.s32.totalorder %v1470, %v1475
      %vm1477 = vmand %vm1474, %vm1476
      %v1478 = vsel %vm1477, 1.0, 0.0
      %v1480 = vsel %vm547, %v1462, 0
      %v1483 = vsel %vm547, %v1464, 0
      %v1486 = vsel %vm547, %v1466, 0
      %v1489 = vsel %vm547, %v1468, 0
      %1491 = vmatprep.subr.mxu0 0.0
      %1492 = vmatpush1.msra.mxu0 %v1478
      %1493 = vmatprep.subr.mxu0 0.0
      %1494 = vmatpush1.msra.mxu0 0.0
      %1495 = vmatprep.subr.mxu0 0.0
      %1496 = vmatpush1.msra.mxu0 0.0
      %1497 = vmatprep.subr.mxu0 0.0
      %1498 = vmatpush1.msra.mxu0 0.0
      %1499 = vmatprep.subr.mxu0 0.0
      %1500 = vmatpush1.msra.mxu0 0.0
      %1501 = vmatprep.subr.mxu0 0.0
      %1502 = vmatpush1.msra.mxu0 0.0
      %1503 = vmatprep.subr.mxu0 0.0
      %1504 = vmatpush1.msra.mxu0 0.0
      %1505 = vmatprep.subr.mxu0 0.0
      %1506 = vmatpush1.msra.mxu0 0.0
      %1507 = vmatprep.subr.mxu0 0.0
      %1508 = vmatpush1.msra.mxu0 0.0
      %1509 = vmatprep.subr.mxu0 0.0
      %1510 = vmatpush1.msra.mxu0 0.0
      %1511 = vmatprep.subr.mxu0 0.0
      %1512 = vmatpush1.msra.mxu0 0.0
      %1513 = vmatprep.subr.mxu0 0.0
      %1514 = vmatpush1.msra.mxu0 0.0
      %1515 = vmatprep.subr.mxu0 0.0
      %1516 = vmatpush1.msra.mxu0 0.0
      %1517 = vmatprep.subr.mxu0 0.0
      %1518 = vmatpush1.msra.mxu0 0.0
      %1519 = vmatprep.subr.mxu0 0.0
      %1520 = vmatpush1.msra.mxu0 0.0
      %1521 = vmatprep.subr.mxu0 0.0
      %1522 = vmatpush1.msra.mxu0 0.0
      %1523 = vmatprep.subr.mxu0 0.0
      %1524 = vmatpush1.msra.mxu0 0.0
      %1525 = vmatprep.subr.mxu0 0.0
      %1526 = vmatpush1.msra.mxu0 0.0
      %1527 = vmatprep.subr.mxu0 0.0
      %1528 = vmatpush1.msra.mxu0 0.0
      %1529 = vmatprep.subr.mxu0 0.0
      %1530 = vmatpush1.msra.mxu0 0.0
      %1531 = vmatprep.subr.mxu0 0.0
      %1532 = vmatpush1.msra.mxu0 0.0
      %1533 = vmatprep.subr.mxu0 0.0
      %1534 = vmatpush1.msra.mxu0 0.0
      %1535 = vmatprep.subr.mxu0 0.0
      %1536 = vmatpush1.msra.mxu0 0.0
      %1537 = vmatprep.subr.mxu0 0.0
      %1538 = vmatpush1.msra.mxu0 0.0
      %1539 = vmatprep.subr.mxu0 0.0
      %1540 = vmatpush1.msra.mxu0 0.0
      %1541 = vmatprep.subr.mxu0 0.0
      %1542 = vmatpush1.msra.mxu0 0.0
      %1543 = vmatprep.subr.mxu0 0.0
      %1544 = vmatpush1.msra.mxu0 0.0
      %1545 = vmatprep.subr.mxu0 0.0
      %1546 = vmatpush1.msra.mxu0 0.0
      %1547 = vmatprep.subr.mxu0 0.0
      %1548 = vmatpush1.msra.mxu0 0.0
      %1549 = vmatprep.subr.mxu0 0.0
      %1550 = vmatpush1.msra.mxu0 0.0
      %1551 = vmatprep.subr.mxu0 0.0
      %1552 = vmatpush1.msra.mxu0 0.0
      %1553 = vmatprep.subr.mxu0 0.0
      %1554 = vmatpush1.msra.mxu0 0.0
      %1555 = vmatprep.mubr.f32.mxu0 0.0
      %1556 = vmatmul.mubr.f32.gmra.mrb[0].mxu0 %v1480
      %v1557 = vpop.f32.mrb[0].mxu0
      %v1558 = vadd.f32 0.0, %v1557
      %v1559 = vpop.f32.mrb[0].mxu0
      %1560 = vmatprep.mubr.f32.mxu0 0.0
      %1561 = vmatmul.mubr.f32.gmra.mrb[0].mxu0 %v1483
      %v1562 = vpop.f32.mrb[0].mxu0
      %v1563 = vadd.f32 0.0, %v1562
      %v1564 = vpop.f32.mrb[0].mxu0
      %1565 = vmatprep.mubr.f32.mxu0 0.0
      %1566 = vmatmul.mubr.f32.gmra.mrb[0].mxu0 %v1486
      %v1567 = vpop.f32.mrb[0].mxu0
      %v1568 = vadd.f32 0.0, %v1567
      %v1569 = vpop.f32.mrb[0].mxu0
      %1570 = vmatprep.mubr.f32.mxu0 0.0
      %1571 = vmatmul.mubr.f32.gmra.mrb[0].mxu0 %v1489
      %v1572 = vpop.f32.mrb[0].mxu0
      %v1573 = vadd.f32 0.0, %v1572
      %v1574 = vpop.f32.mrb[0].mxu0
      %1575 = vdwg.mxu0
      %v1576 = vld [vmem:[%s166] sm:$0xff]
      %v1577 = vld [vmem:[%s166 + $0x8] sm:$0xff]
      %v1578 = vld [vmem:[%s166 + $0x10] sm:$0xff]
      %v1579 = vld [vmem:[%s166 + $0x18] sm:$0xff]
      %v1580 = vmul.f32 %v1576, %v1558
      %v1581 = vmul.f32 %v1577, %v1563
      %v1582 = vmul.f32 %v1578, %v1568
      %v1583 = vmul.f32 %v1579, %v1573
      %1584 = vst [vmem:[%s171] sm:$0xff] %v1580
      %1585 = vst [vmem:[%s171 + $0x8] sm:$0xff] %v1581
      %1586 = vst [vmem:[%s171 + $0x10] sm:$0xff] %v1582
      %1587 = vst [vmem:[%s171 + $0x18] sm:$0xff] %v1583
      %p1588 = scmp.lt.s32.totalorder %s15, 1
      %s1589 = scalar_select %p1588, %s15, 1
      %s1590 = smul.addr %s1589, 4
      %s1591 = smul.addr %s1590, 8
      %s1592 = scalar_lea.vmem %s3, %s1591
      // Predicated region
      $region33: #{spatial_att.1} parent=31 // pred_check
        %p1593 = pneg %p101
      $region34: #{spatial_att.1} parent=31 // pred_check_branch
        %1595 = sbr.rel (%p1593) target = $region36
      $region35: #{spatial_att.1} parent=31 // pred_region
        _
      $region36: #{spatial_att.1} parent=31 // pred_fallthru
        _
    $region32: #{spatial_att.1} parent=5 // pred_fallthru
      _
    %p1596 = scmp.le.s32.totalorder 2, %s10
    // Predicated region
    $region37: #{spatial_att.1} parent=5 // pred_check
      %p1597 = pneg %p1596
    $region38: #{spatial_att.1} parent=5 // pred_check_branch
      %1599 = sbr.rel (%p1597) target = $region40
    $region39: #{spatial_att.1} parent=5 // pred_region
      %s1600 = ssub.s32 %s10, 2
      // Predicated region
      $region41: #{spatial_att.1} parent=39 // pred_check
        %p1601 = pneg %p107
      $region42: #{spatial_att.1} parent=39 // pred_check_branch
        %1603 = sbr.rel (%p1601) target = $region44
      $region43: #{spatial_att.1} parent=39 // pred_region
        %p1604 = scmp.lt.s32.totalorder %s16, 1
        %s1605 = scalar_select %p1604, %s16, 1
        %s1606 = smul.addr %s1605, 4
        %s1607 = smul.addr %s1606, 8
        %s1608 = scalar_lea.vmem %s3, %s1607
      $region44: #{spatial_att.1} parent=39 // pred_fallthru
        _
    $region40: #{spatial_att.1} parent=5 // pred_fallthru
      _
  $region6: #{spatial_att.1} parent=0 // loop_footer
    %s14 = sadd.s32 1, %s10
  $region7: #{spatial_att.1} parent=0 // loop_footer_branch
    %9 = sbr.rel target = $region3
  $region8: #{spatial_att.1} parent=0 // loop_exit
    _

</llo_original>
